<compile_context>
chip_gen: v5e
topology: v5e:2x2
jax: 0.10.0
libtpu: 0.0.40
codegen_flags: <defaults>
</compile_context>

<pallas_src>
import jax
import jax.numpy as jnp
from jax.experimental import pallas as pl
from jax.experimental.pallas import tpu as pltpu

EPS = 1e-5
LANE = 128


def _round_up(x, m):
    return ((x + m - 1) // m) * m


def _pick_tile(n, candidates):
    for c in candidates:
        if c <= n and n % c == 0:
            return c
    return n


def _vmem_cap():
    # Generation-aware cap: v5e/v6e have 128 MiB VMEM per core, v7x only 64.
    try:
        kind = jax.devices()[0].device_kind.lower()
    except Exception:
        kind = ""
    if "v5" in kind or "v6" in kind:
        return 100 << 20
    return 48 << 20


def _vmem_limit(need_bytes):
    return int(min(max(int(need_bytes), 32 << 20), _vmem_cap()))


# ---------------------------------------------------------------------------
# Kernel A: fully fused forward for small graphs (everything VMEM-resident)
#   3x [ (A_hat @ h) @ W  * scale + shift, ReLU ]  ->  mean pool  ->  head
# ---------------------------------------------------------------------------
def fused_forward_kernel(a_ref, x_ref,
                         w1_ref, sc1_ref, sh1_ref,
                         w2_ref, sc2_ref, sh2_ref,
                         w3_ref, sc3_ref, sh3_ref,
                         oh_ref, inv_ref,
                         l1_ref, sc4_ref, sh4_ref,
                         l2_ref, b2_ref,
                         o_ref):
    a = a_ref[...]

    def layer(h, w_ref, sc_ref, sh_ref):
        ah = jnp.dot(a, h, preferred_element_type=jnp.float32)
        y = jnp.dot(ah.astype(jnp.bfloat16), w_ref[...],
                    preferred_element_type=jnp.float32)
        y = jnp.maximum(y * sc_ref[...] + sh_ref[...], 0.0)
        return y.astype(jnp.bfloat16)

    h = layer(x_ref[...], w1_ref, sc1_ref, sh1_ref)
    h = layer(h, w2_ref, sc2_ref, sh2_ref)
    h = layer(h, w3_ref, sc3_ref, sh3_ref)

    pooled = jnp.dot(oh_ref[...], h, preferred_element_type=jnp.float32)
    pooled = (pooled * inv_ref[...]).astype(jnp.bfloat16)

    z = jnp.dot(pooled, l1_ref[...], preferred_element_type=jnp.float32)
    z = jnp.maximum(z * sc4_ref[...] + sh4_ref[...], 0.0).astype(jnp.bfloat16)
    o_ref[...] = (jnp.dot(z, l2_ref[...], preferred_element_type=jnp.float32)
                  + b2_ref[...])


def fused_forward(a_hat, x, prep, onehot, inv_counts, b_pad, c_pad):
    n = a_hat.shape[0]
    args = (
        a_hat, x,
        prep["conv1_w"], prep["bn1_scale"].reshape(1, -1), prep["bn1_shift"].reshape(1, -1),
        prep["conv2_w"], prep["bn2_scale"].reshape(1, -1), prep["bn2_shift"].reshape(1, -1),
        prep["conv3_w"], prep["bn3_scale"].reshape(1, -1), prep["bn3_shift"].reshape(1, -1),
        onehot, inv_counts,
        prep["lin1_w"], prep["bn4_scale"].reshape(1, -1), prep["bn4_shift"].reshape(1, -1),
        prep["lin2_w"], prep["lin2_b"].reshape(1, -1),
    )
    need = sum(int(a.size) * a.dtype.itemsize for a in args)
    need += n * 2048 + (4 << 20)          # in-kernel f32 temporaries + headroom
    return pl.pallas_call(
        fused_forward_kernel,
        out_shape=jax.ShapeDtypeStruct((b_pad, c_pad), jnp.float32),
        compiler_params=pltpu.CompilerParams(vmem_limit_bytes=_vmem_limit(need)),
    )(*args)


# ---------------------------------------------------------------------------
# Kernel B: tiled GCN layer  y = relu( ((A_hat @ X) @ W) * scale + shift )
#   grid = (row tiles i, K tiles k); X is VMEM-resident (constant index_map),
#   A streamed; f32 accumulator; W/BN/ReLU applied in the k==last epilogue.
# ---------------------------------------------------------------------------
def gcn_layer_kernel(a_ref, x_ref, w_ref, sc_ref, sh_ref, o_ref, acc_ref):
    k = pl.program_id(1)

    @pl.when(k == 0)
    def _():
        acc_ref[...] = jnp.zeros_like(acc_ref)

    tk = a_ref.shape[1]
    kk = pl.multiple_of(k * tk, tk)
    acc_ref[...] += jnp.dot(a_ref[...], x_ref[pl.ds(kk, tk), :],
                            preferred_element_type=jnp.float32)

    @pl.when(k == pl.num_programs(1) - 1)
    def _():
        ah = acc_ref[...].astype(jnp.bfloat16)
        y = jnp.dot(ah, w_ref[...], preferred_element_type=jnp.float32)
        y = y * sc_ref[...] + sh_ref[...]
        o_ref[...] = jnp.maximum(y, 0.0).astype(o_ref.dtype)


def gcn_layer_tiled(a_hat, x, w, scale, shift):
    n = a_hat.shape[0]
    f_in = x.shape[1]
    f_out = w.shape[1]
    tm = _pick_tile(n, (512, 256, 128))
    tk = _pick_tile(n, (2048, 1024, 512, 256, 128))   # keep K a multiple of 256
    sc = scale.reshape(1, -1).astype(jnp.float32)
    sh = shift.reshape(1, -1).astype(jnp.float32)
    need = (2 * tm * tk * 2            # streamed A tiles (double buffered)
            + 2 * n * f_in * 2         # resident X (conservatively x2)
            + f_in * f_out * 2
            + tm * f_in * 4            # f32 accumulator
            + 2 * tm * f_out * 2       # output tiles
            + (4 << 20))
    return pl.pallas_call(
        gcn_layer_kernel,
        out_shape=jax.ShapeDtypeStruct((n, f_out), jnp.bfloat16),
        grid=(n // tm, n // tk),
        in_specs=[
            pl.BlockSpec((tm, tk), lambda i, k: (i, k)),
            pl.BlockSpec((n, f_in), lambda i, k: (0, 0)),      # VMEM resident
            pl.BlockSpec((f_in, f_out), lambda i, k: (0, 0)),
            pl.BlockSpec((1, f_out), lambda i, k: (0, 0)),
            pl.BlockSpec((1, f_out), lambda i, k: (0, 0)),
        ],
        out_specs=pl.BlockSpec((tm, f_out), lambda i, k: (i, 0)),
        scratch_shapes=[pltpu.VMEM((tm, f_in), jnp.float32)],
        compiler_params=pltpu.CompilerParams(
            dimension_semantics=("parallel", "arbitrary"),
            vmem_limit_bytes=_vmem_limit(need)),
    )(a_hat, x, w, sc, sh)


# ---------------------------------------------------------------------------
# Kernel C: conv3 + global_mean_pool + MLP head fused (tiled, large graphs)
# ---------------------------------------------------------------------------
def gcn3_pool_head_kernel(a_ref, x_ref, w_ref, sc_ref, sh_ref,
                          oh_ref, inv_ref, w1_ref, sc4_ref, sh4_ref,
                          w2_ref, b2_ref, o_ref, acc_ref, pool_ref):
    i = pl.program_id(0)
    k = pl.program_id(1)
    i_last = pl.num_programs(0) - 1
    k_last = pl.num_programs(1) - 1

    @pl.when(jnp.logical_and(i == 0, k == 0))
    def _():
        pool_ref[...] = jnp.zeros_like(pool_ref)

    @pl.when(k == 0)
    def _():
        acc_ref[...] = jnp.zeros_like(acc_ref)

    tk = a_ref.shape[1]
    kk = pl.multiple_of(k * tk, tk)
    acc_ref[...] += jnp.dot(a_ref[...], x_ref[pl.ds(kk, tk), :],
                            preferred_element_type=jnp.float32)

    @pl.when(k == k_last)
    def _():
        ah = acc_ref[...].astype(jnp.bfloat16)
        y = jnp.dot(ah, w_ref[...], preferred_element_type=jnp.float32)
        y = jnp.maximum(y * sc_ref[...] + sh_ref[...], 0.0)
        pool_ref[...] += jnp.dot(oh_ref[...], y.astype(jnp.bfloat16),
                                 preferred_element_type=jnp.float32)

    @pl.when(jnp.logical_and(i == i_last, k == k_last))
    def _():
        pooled = (pool_ref[...] * inv_ref[...]).astype(jnp.bfloat16)
        h1 = jnp.dot(pooled, w1_ref[...], preferred_element_type=jnp.float32)
        h1 = jnp.maximum(h1 * sc4_ref[...] + sh4_ref[...], 0.0).astype(jnp.bfloat16)
        o_ref[...] = (jnp.dot(h1, w2_ref[...], preferred_element_type=jnp.float32)
                      + b2_ref[...])


def gcn3_pool_head(a_hat, x, w, scale, shift, onehot, inv_counts,
                   w1, sc4, sh4, w2, b2):
    n = a_hat.shape[0]
    f_in = x.shape[1]
    f_out = w.shape[1]
    b_pad = onehot.shape[0]
    hid = w1.shape[1]
    c_pad = w2.shape[1]
    tm = _pick_tile(n, (512, 256, 128))
    tk = _pick_tile(n, (2048, 1024, 512, 256, 128))
    sc = scale.reshape(1, -1).astype(jnp.float32)
    sh = shift.reshape(1, -1).astype(jnp.float32)
    sc4 = sc4.reshape(1, -1).astype(jnp.float32)
    sh4 = sh4.reshape(1, -1).astype(jnp.float32)
    b2 = b2.reshape(1, -1).astype(jnp.float32)
    need = (2 * tm * tk * 2 + 2 * n * f_in * 2 + f_in * f_out * 2
            + tm * f_in * 4 + b_pad * f_out * 4 + 2 * b_pad * tm * 2
            + f_out * hid * 2 + hid * c_pad * 2 + (4 << 20))
    return pl.pallas_call(
        gcn3_pool_head_kernel,
        out_shape=jax.ShapeDtypeStruct((b_pad, c_pad), jnp.float32),
        grid=(n // tm, n // tk),
        in_specs=[
            pl.BlockSpec((tm, tk), lambda i, k: (i, k)),
            pl.BlockSpec((n, f_in), lambda i, k: (0, 0)),
            pl.BlockSpec((f_in, f_out), lambda i, k: (0, 0)),
            pl.BlockSpec((1, f_out), lambda i, k: (0, 0)),
            pl.BlockSpec((1, f_out), lambda i, k: (0, 0)),
            pl.BlockSpec((b_pad, tm), lambda i, k: (0, i)),
            pl.BlockSpec((b_pad, 1), lambda i, k: (0, 0)),
            pl.BlockSpec((f_out, hid), lambda i, k: (0, 0)),
            pl.BlockSpec((1, hid), lambda i, k: (0, 0)),
            pl.BlockSpec((1, hid), lambda i, k: (0, 0)),
            pl.BlockSpec((hid, c_pad), lambda i, k: (0, 0)),
            pl.BlockSpec((1, c_pad), lambda i, k: (0, 0)),
        ],
        out_specs=pl.BlockSpec((b_pad, c_pad), lambda i, k: (0, 0)),
        scratch_shapes=[pltpu.VMEM((tm, f_in), jnp.float32),
                        pltpu.VMEM((b_pad, f_out), jnp.float32)],
        compiler_params=pltpu.CompilerParams(
            dimension_semantics=("arbitrary", "arbitrary"),
            vmem_limit_bytes=_vmem_limit(need)),
    )(a_hat, x, w, sc, sh, onehot, inv_counts, w1, sc4, sh4, w2, b2)


# ---------------------------------------------------------------------------
# JAX glue: normalized adjacency, pooling operands, param folding/padding
# ---------------------------------------------------------------------------
def gcn_norm_adj(edge_index, num_nodes, n_pad):
    row, col = edge_index[0], edge_index[1]
    loop = jnp.arange(num_nodes, dtype=edge_index.dtype)
    row = jnp.concatenate([row, loop])
    col = jnp.concatenate([col, loop])
    deg = jnp.zeros((num_nodes,), jnp.float32).at[col].add(1.0)
    dinv = jnp.where(deg > 0, 1.0 / jnp.sqrt(deg), 0.0)
    vals = dinv[col] * dinv[row]
    # A_hat[target, source] so that out = A_hat @ X aggregates source -> target.
    a = jnp.zeros((num_nodes, num_nodes), jnp.float32).at[col, row].add(vals)
    a = jnp.pad(a, ((0, n_pad - num_nodes), (0, n_pad - num_nodes)))
    return a.astype(jnp.bfloat16)


def pool_operands(batch, b_pad, num_nodes, n_pad):
    onehot = (batch[None, :] == jnp.arange(b_pad)[:, None]).astype(jnp.float32)
    onehot = jnp.pad(onehot, ((0, 0), (0, n_pad - num_nodes)))
    counts = onehot.sum(axis=1)
    inv = jnp.where(counts > 0, 1.0 / jnp.maximum(counts, 1.0), 0.0)
    return (onehot.astype(jnp.bfloat16),
            inv.reshape(b_pad, 1).astype(jnp.float32))


def init_params(key, num_features, num_classes):
    dims = [(num_features, 64), (64, 128), (128, 256), (256, 512),
            (512, num_classes)]
    names = ["conv1", "conv2", "conv3", "lin1", "lin2"]
    params = {}
    ks = jax.random.split(key, len(dims))
    for name, k, (fi, fo) in zip(names, ks, dims):
        s = jnp.sqrt(6.0 / (fi + fo))
        params[name + "_w"] = jax.random.uniform(k, (fi, fo), jnp.float32, -s, s)
        params[name + "_b"] = jnp.zeros((fo,), jnp.float32)
    for name, f in [("bn1", 64), ("bn2", 128), ("bn3", 256), ("bn4", 512)]:
        params[name + "_g"] = jnp.ones((f,), jnp.float32)
        params[name + "_b"] = jnp.zeros((f,), jnp.float32)
        params[name + "_m"] = jnp.zeros((f,), jnp.float32)   # running_mean
        params[name + "_v"] = jnp.ones((f,), jnp.float32)    # running_var
    return params


def fold_and_pad_params(params):
    """Fold conv bias + BN into scale/shift; pad lane dims to 128; cast bf16."""
    def pad2(w, ri, ro):
        return jnp.pad(w, ((0, ri - w.shape[0]), (0, ro - w.shape[1])))

    def pad1(v, n):
        return jnp.pad(v, (0, n - v.shape[0]))

    out = {}
    for name, bn in [("conv1", "bn1"), ("conv2", "bn2"), ("conv3", "bn3")]:
        w, b = params[name + "_w"], params[name + "_b"]
        g, beta = params[bn + "_g"], params[bn + "_b"]
        m, v = params[bn + "_m"], params[bn + "_v"]
        s = g * jax.lax.rsqrt(v + EPS)
        scale, shift = s, (b - m) * s + beta
        fi_pad = _round_up(w.shape[0], LANE)
        fo_pad = _round_up(w.shape[1], LANE)
        out[name + "_w"] = pad2(w, fi_pad, fo_pad).astype(jnp.bfloat16)
        out[bn + "_scale"] = pad1(scale, fo_pad).astype(jnp.float32)
        out[bn + "_shift"] = pad1(shift, fo_pad).astype(jnp.float32)

    # head: fold lin1 bias + BN4 into scale/shift; pad lin2 output lanes
    g, beta = params["bn4_g"], params["bn4_b"]
    m, v = params["bn4_m"], params["bn4_v"]
    s = g * jax.lax.rsqrt(v + EPS)
    out["lin1_w"] = params["lin1_w"].astype(jnp.bfloat16)        # 256 x 512
    out["bn4_scale"] = s.astype(jnp.float32)
    out["bn4_shift"] = ((params["lin1_b"] - m) * s + beta).astype(jnp.float32)
    w2, b2 = params["lin2_w"], params["lin2_b"]
    c_pad = _round_up(w2.shape[1], LANE)
    out["lin2_w"] = pad2(w2, w2.shape[0], c_pad).astype(jnp.bfloat16)
    out["lin2_b"] = pad1(b2, c_pad).astype(jnp.float32)
    return out


def m1_forward(params, x, edge_index, batch, batch_size):
    num_nodes, num_features = x.shape
    num_classes = params["lin2_w"].shape[1]
    prep = fold_and_pad_params(params)
    f_in_pad = prep["conv1_w"].shape[0]
    c_pad = prep["lin2_w"].shape[1]
    b_pad = _round_up(max(batch_size, 16), 16)

    n_small = _round_up(max(num_nodes, LANE), LANE)
    use_fused = n_small * n_small * 2 <= (8 << 20)      # A_hat bf16 <= 8 MiB
    n_pad = n_small if use_fused else _round_up(num_nodes, 512)

    x_p = jnp.pad(x, ((0, n_pad - num_nodes),
                      (0, f_in_pad - num_features))).astype(jnp.bfloat16)
    a_hat = gcn_norm_adj(edge_index, num_nodes, n_pad)
    onehot, inv_counts = pool_operands(batch, b_pad, num_nodes, n_pad)

    if use_fused:
        out = fused_forward(a_hat, x_p, prep, onehot, inv_counts, b_pad, c_pad)
    else:
        h = gcn_layer_tiled(a_hat, x_p, prep["conv1_w"],
                            prep["bn1_scale"], prep["bn1_shift"])
        h = gcn_layer_tiled(a_hat, h, prep["conv2_w"],
                            prep["bn2_scale"], prep["bn2_shift"])
        out = gcn3_pool_head(a_hat, h, prep["conv3_w"],
                             prep["bn3_scale"], prep["bn3_shift"],
                             onehot, inv_counts,
                             prep["lin1_w"], prep["bn4_scale"],
                             prep["bn4_shift"], prep["lin2_w"], prep["lin2_b"])
    return out[:batch_size, :num_classes]


if __name__ == "__main__":
    num_features = 16
    num_classes = 8
    num_nodes = 32
    num_edges = 64
    batch_size = 4

    key = jax.random.PRNGKey(0)
    k_x, k_e, k_p = jax.random.split(key, 3)

    x = jax.random.normal(k_x, (num_nodes, num_features), jnp.float32)
    edge_index = jax.random.randint(k_e, (2, num_edges), 0, num_nodes,
                                    dtype=jnp.int32)
    batch = jnp.repeat(jnp.arange(batch_size, dtype=jnp.int32),
                       num_nodes // batch_size)

    params = init_params(k_p, num_features, num_classes)

    out = m1_forward(params, x, edge_index, batch, batch_size)
    out = jax.block_until_ready(out)
    assert out.shape == (batch_size, num_classes)
    assert jnp.all(jnp.isfinite(out))
    print("KERNEL_OK")
</pallas_src>

<mosaic_0001>
module attributes {stable_mosaic.version = 11 : i64} {
  func.func @fused_forward_kernel(%arg0: memref<128x128xbf16, #tpu.memory_space<vmem>>, %arg1: memref<128x128xbf16, #tpu.memory_space<vmem>>, %arg2: memref<128x128xbf16, #tpu.memory_space<vmem>>, %arg3: memref<1x128xf32, #tpu.memory_space<vmem>>, %arg4: memref<1x128xf32, #tpu.memory_space<vmem>>, %arg5: memref<128x128xbf16, #tpu.memory_space<vmem>>, %arg6: memref<1x128xf32, #tpu.memory_space<vmem>>, %arg7: memref<1x128xf32, #tpu.memory_space<vmem>>, %arg8: memref<128x256xbf16, #tpu.memory_space<vmem>>, %arg9: memref<1x256xf32, #tpu.memory_space<vmem>>, %arg10: memref<1x256xf32, #tpu.memory_space<vmem>>, %arg11: memref<16x128xbf16, #tpu.memory_space<vmem>>, %arg12: memref<16x1xf32, #tpu.memory_space<vmem>>, %arg13: memref<256x512xbf16, #tpu.memory_space<vmem>>, %arg14: memref<1x512xf32, #tpu.memory_space<vmem>>, %arg15: memref<1x512xf32, #tpu.memory_space<vmem>>, %arg16: memref<512x128xbf16, #tpu.memory_space<vmem>>, %arg17: memref<1x128xf32, #tpu.memory_space<vmem>>, %arg18: memref<16x128xf32, #tpu.memory_space<vmem>>) attributes {dimension_semantics = [], scalar_prefetch = 0 : i64, scratch_operands = 0 : i64, tpu.core_type = #tpu.core_type<tc>} {
    %c0 = arith.constant 0 : index
    %c0_0 = arith.constant 0 : index
    %0 = vector.load %arg0[%c0, %c0_0] : memref<128x128xbf16, #tpu.memory_space<vmem>>, vector<128x128xbf16>
    %c0_1 = arith.constant 0 : index
    %c0_2 = arith.constant 0 : index
    %1 = vector.load %arg1[%c0_1, %c0_2] : memref<128x128xbf16, #tpu.memory_space<vmem>>, vector<128x128xbf16>
    %cst = arith.constant dense<0.000000e+00> : vector<128x128xf32>
    %2 = tpu.matmul %0, %1, %cst {dimension_numbers = #tpu.dot_dimension_numbers<[1], [0], [0], [1], [0, 0, 1, 1], [], []>} : vector<128x128xbf16>, vector<128x128xbf16>, vector<128x128xf32> -> vector<128x128xf32>
    %3 = arith.truncf %2 : vector<128x128xf32> to vector<128x128xbf16>
    %c0_3 = arith.constant 0 : index
    %c0_4 = arith.constant 0 : index
    %4 = vector.load %arg2[%c0_3, %c0_4] : memref<128x128xbf16, #tpu.memory_space<vmem>>, vector<128x128xbf16>
    %cst_5 = arith.constant dense<0.000000e+00> : vector<128x128xf32>
    %5 = tpu.matmul %3, %4, %cst_5 {dimension_numbers = #tpu.dot_dimension_numbers<[1], [0], [0], [1], [0, 0, 1, 1], [], []>} : vector<128x128xbf16>, vector<128x128xbf16>, vector<128x128xf32> -> vector<128x128xf32>
    %c0_6 = arith.constant 0 : index
    %c0_7 = arith.constant 0 : index
    %6 = vector.load %arg3[%c0_6, %c0_7] : memref<1x128xf32, #tpu.memory_space<vmem>>, vector<1x128xf32>
    %7 = vector.broadcast %6 : vector<1x128xf32> to vector<128x128xf32>
    %8 = arith.mulf %5, %7 : vector<128x128xf32>
    %c0_8 = arith.constant 0 : index
    %c0_9 = arith.constant 0 : index
    %9 = vector.load %arg4[%c0_8, %c0_9] : memref<1x128xf32, #tpu.memory_space<vmem>>, vector<1x128xf32>
    %10 = vector.broadcast %9 : vector<1x128xf32> to vector<128x128xf32>
    %11 = arith.addf %8, %10 : vector<128x128xf32>
    %cst_10 = arith.constant 0.000000e+00 : f32
    %12 = vector.broadcast %cst_10 : f32 to vector<128x128xf32>
    %13 = arith.maximumf %11, %12 : vector<128x128xf32>
    %14 = arith.truncf %13 : vector<128x128xf32> to vector<128x128xbf16>
    %cst_11 = arith.constant dense<0.000000e+00> : vector<128x128xf32>
    %15 = tpu.matmul %0, %14, %cst_11 {dimension_numbers = #tpu.dot_dimension_numbers<[1], [0], [0], [1], [0, 0, 1, 1], [], []>} : vector<128x128xbf16>, vector<128x128xbf16>, vector<128x128xf32> -> vector<128x128xf32>
    %16 = arith.truncf %15 : vector<128x128xf32> to vector<128x128xbf16>
    %c0_12 = arith.constant 0 : index
    %c0_13 = arith.constant 0 : index
    %17 = vector.load %arg5[%c0_12, %c0_13] : memref<128x128xbf16, #tpu.memory_space<vmem>>, vector<128x128xbf16>
    %cst_14 = arith.constant dense<0.000000e+00> : vector<128x128xf32>
    %18 = tpu.matmul %16, %17, %cst_14 {dimension_numbers = #tpu.dot_dimension_numbers<[1], [0], [0], [1], [0, 0, 1, 1], [], []>} : vector<128x128xbf16>, vector<128x128xbf16>, vector<128x128xf32> -> vector<128x128xf32>
    %c0_15 = arith.constant 0 : index
    %c0_16 = arith.constant 0 : index
    %19 = vector.load %arg6[%c0_15, %c0_16] : memref<1x128xf32, #tpu.memory_space<vmem>>, vector<1x128xf32>
    %20 = vector.broadcast %19 : vector<1x128xf32> to vector<128x128xf32>
    %21 = arith.mulf %18, %20 : vector<128x128xf32>
    %c0_17 = arith.constant 0 : index
    %c0_18 = arith.constant 0 : index
    %22 = vector.load %arg7[%c0_17, %c0_18] : memref<1x128xf32, #tpu.memory_space<vmem>>, vector<1x128xf32>
    %23 = vector.broadcast %22 : vector<1x128xf32> to vector<128x128xf32>
    %24 = arith.addf %21, %23 : vector<128x128xf32>
    %cst_19 = arith.constant 0.000000e+00 : f32
    %25 = vector.broadcast %cst_19 : f32 to vector<128x128xf32>
    %26 = arith.maximumf %24, %25 : vector<128x128xf32>
    %27 = arith.truncf %26 : vector<128x128xf32> to vector<128x128xbf16>
    %cst_20 = arith.constant dense<0.000000e+00> : vector<128x128xf32>
    %28 = tpu.matmul %0, %27, %cst_20 {dimension_numbers = #tpu.dot_dimension_numbers<[1], [0], [0], [1], [0, 0, 1, 1], [], []>} : vector<128x128xbf16>, vector<128x128xbf16>, vector<128x128xf32> -> vector<128x128xf32>
    %29 = arith.truncf %28 : vector<128x128xf32> to vector<128x128xbf16>
    %c0_21 = arith.constant 0 : index
    %c0_22 = arith.constant 0 : index
    %30 = vector.load %arg8[%c0_21, %c0_22] : memref<128x256xbf16, #tpu.memory_space<vmem>>, vector<128x256xbf16>
    %cst_23 = arith.constant dense<0.000000e+00> : vector<128x256xf32>
    %31 = tpu.matmul %29, %30, %cst_23 {dimension_numbers = #tpu.dot_dimension_numbers<[1], [0], [0], [1], [0, 0, 1, 1], [], []>} : vector<128x128xbf16>, vector<128x256xbf16>, vector<128x256xf32> -> vector<128x256xf32>
    %c0_24 = arith.constant 0 : index
    %c0_25 = arith.constant 0 : index
    %32 = vector.load %arg9[%c0_24, %c0_25] : memref<1x256xf32, #tpu.memory_space<vmem>>, vector<1x256xf32>
    %33 = vector.broadcast %32 : vector<1x256xf32> to vector<128x256xf32>
    %34 = arith.mulf %31, %33 : vector<128x256xf32>
    %c0_26 = arith.constant 0 : index
    %c0_27 = arith.constant 0 : index
    %35 = vector.load %arg10[%c0_26, %c0_27] : memref<1x256xf32, #tpu.memory_space<vmem>>, vector<1x256xf32>
    %36 = vector.broadcast %35 : vector<1x256xf32> to vector<128x256xf32>
    %37 = arith.addf %34, %36 : vector<128x256xf32>
    %cst_28 = arith.constant 0.000000e+00 : f32
    %38 = vector.broadcast %cst_28 : f32 to vector<128x256xf32>
    %39 = arith.maximumf %37, %38 : vector<128x256xf32>
    %40 = arith.truncf %39 : vector<128x256xf32> to vector<128x256xbf16>
    %c0_29 = arith.constant 0 : index
    %c0_30 = arith.constant 0 : index
    %41 = vector.load %arg11[%c0_29, %c0_30] : memref<16x128xbf16, #tpu.memory_space<vmem>>, vector<16x128xbf16>
    %cst_31 = arith.constant dense<0.000000e+00> : vector<16x256xf32>
    %42 = tpu.matmul %41, %40, %cst_31 {dimension_numbers = #tpu.dot_dimension_numbers<[1], [0], [0], [1], [0, 0, 1, 1], [], []>} : vector<16x128xbf16>, vector<128x256xbf16>, vector<16x256xf32> -> vector<16x256xf32>
    %c0_32 = arith.constant 0 : index
    %c0_33 = arith.constant 0 : index
    %43 = vector.load %arg12[%c0_32, %c0_33] : memref<16x1xf32, #tpu.memory_space<vmem>>, vector<16x1xf32>
    %44 = vector.broadcast %43 : vector<16x1xf32> to vector<16x256xf32>
    %45 = arith.mulf %42, %44 : vector<16x256xf32>
    %46 = arith.truncf %45 : vector<16x256xf32> to vector<16x256xbf16>
    %c0_34 = arith.constant 0 : index
    %c0_35 = arith.constant 0 : index
    %47 = vector.load %arg13[%c0_34, %c0_35] : memref<256x512xbf16, #tpu.memory_space<vmem>>, vector<256x512xbf16>
    %cst_36 = arith.constant dense<0.000000e+00> : vector<16x512xf32>
    %48 = tpu.matmul %46, %47, %cst_36 {dimension_numbers = #tpu.dot_dimension_numbers<[1], [0], [0], [1], [0, 0, 1, 1], [], []>} : vector<16x256xbf16>, vector<256x512xbf16>, vector<16x512xf32> -> vector<16x512xf32>
    %c0_37 = arith.constant 0 : index
    %c0_38 = arith.constant 0 : index
    %49 = vector.load %arg14[%c0_37, %c0_38] : memref<1x512xf32, #tpu.memory_space<vmem>>, vector<1x512xf32>
    %50 = vector.broadcast %49 : vector<1x512xf32> to vector<16x512xf32>
    %51 = arith.mulf %48, %50 : vector<16x512xf32>
    %c0_39 = arith.constant 0 : index
    %c0_40 = arith.constant 0 : index
    %52 = vector.load %arg15[%c0_39, %c0_40] : memref<1x512xf32, #tpu.memory_space<vmem>>, vector<1x512xf32>
    %53 = vector.broadcast %52 : vector<1x512xf32> to vector<16x512xf32>
    %54 = arith.addf %51, %53 : vector<16x512xf32>
    %cst_41 = arith.constant 0.000000e+00 : f32
    %55 = vector.broadcast %cst_41 : f32 to vector<16x512xf32>
    %56 = arith.maximumf %54, %55 : vector<16x512xf32>
    %57 = arith.truncf %56 : vector<16x512xf32> to vector<16x512xbf16>
    %c0_42 = arith.constant 0 : index
    %c0_43 = arith.constant 0 : index
    %58 = vector.load %arg16[%c0_42, %c0_43] : memref<512x128xbf16, #tpu.memory_space<vmem>>, vector<512x128xbf16>
    %cst_44 = arith.constant dense<0.000000e+00> : vector<16x128xf32>
    %59 = tpu.matmul %57, %58, %cst_44 {dimension_numbers = #tpu.dot_dimension_numbers<[1], [0], [0], [1], [0, 0, 1, 1], [], []>} : vector<16x512xbf16>, vector<512x128xbf16>, vector<16x128xf32> -> vector<16x128xf32>
    %c0_45 = arith.constant 0 : index
    %c0_46 = arith.constant 0 : index
    %60 = vector.load %arg17[%c0_45, %c0_46] : memref<1x128xf32, #tpu.memory_space<vmem>>, vector<1x128xf32>
    %61 = vector.broadcast %60 : vector<1x128xf32> to vector<16x128xf32>
    %62 = arith.addf %59, %61 : vector<16x128xf32>
    %c0_47 = arith.constant 0 : index
    %c0_48 = arith.constant 0 : index
    %63 = vector.load %arg18[%c0_47, %c0_48] : memref<16x128xf32, #tpu.memory_space<vmem>>, vector<16x128xf32>
    tpu.vector_store %arg18[%c0_47, %c0_48], %62 {strides = array<i32>} : memref<16x128xf32, #tpu.memory_space<vmem>>, vector<16x128xf32>,
    return
  }
}

</mosaic_0001>

<llo_original>
// kernel: tpu_custom_call.1
$region0: #{tpu_custom_call.1}
  #allocation0 [shape = 'u32[]', space=smem, size = 0x4, offset = 0x4, fixed_abs, tag = 'smem constant byte address 0x4 - core index']
  #allocation1 [shape = 'u32[72,128]{1,0:T(1,128)}', space=vmem, size = 0x9000, scoped, tag = 'internal scratch']
  %s0 = inlined_call_operand.hbm [shape: bf16[128,128], index: 0, kind: input, shape index: {}]
  %s1 = inlined_call_operand.hbm [shape: bf16[128,128], index: 1, kind: input, shape index: {}]
  %s2 = inlined_call_operand.hbm [shape: bf16[128,128], index: 2, kind: input, shape index: {}]
  %s3 = inlined_call_operand.vmem [shape: f32[1,128], index: 3, kind: input, shape index: {}]
  %s4 = inlined_call_operand.hbm [shape: f32[1,128], index: 4, kind: input, shape index: {}]
  %s5 = inlined_call_operand.hbm [shape: bf16[128,128], index: 5, kind: input, shape index: {}]
  %s6 = inlined_call_operand.hbm [shape: f32[1,128], index: 6, kind: input, shape index: {}]
  %s7 = inlined_call_operand.vmem [shape: f32[1,128], index: 7, kind: input, shape index: {}]
  %s8 = inlined_call_operand.hbm [shape: bf16[128,256], index: 8, kind: input, shape index: {}]
  %s9 = inlined_call_operand.vmem [shape: f32[1,256], index: 9, kind: input, shape index: {}]
  %s10 = inlined_call_operand.vmem [shape: f32[1,256], index: 10, kind: input, shape index: {}]
  %s11 = inlined_call_operand.vmem [shape: bf16[16,128], index: 11, kind: input, shape index: {}]
  %s12 = inlined_call_operand.vmem [shape: f32[16,1], index: 12, kind: input, shape index: {}]
  %s13 = inlined_call_operand.hbm [shape: bf16[256,512], index: 13, kind: input, shape index: {}]
  %s14 = inlined_call_operand.vmem [shape: f32[1,512], index: 14, kind: input, shape index: {}]
  %s15 = inlined_call_operand.vmem [shape: f32[1,512], index: 15, kind: input, shape index: {}]
  %s16 = inlined_call_operand.hbm [shape: bf16[512,128], index: 16, kind: input, shape index: {}]
  %s17 = inlined_call_operand.vmem [shape: f32[1,128], index: 17, kind: input, shape index: {}]
  %s18 = inlined_call_operand.hbm [shape: f32[16,128], index: 18, kind: output, shape index: {}]
  %s19 = sld [smem:[#allocation0]]
  $region118: #{tpu_custom_call.1} parent=0
    _
  %s21 = ssub.s32 1, %s19
  %s22 = scalar_select 0, %s21, %s19
  $region1: #{tpu_custom_call.1} parent=0
    #allocation2 [shape = 'u8[32768]{0}', space=vmem, size = 0x8000, scoped, tag = 'input window, operand 0, single buffered']
    #allocation3 [shape = 's32[1]{0}', space=sflag, size = 0x4, scoped, tag = 'scoped memory for tpu_custom_call.1']
    #allocation4 [shape = 's32[1]{0}', space=sflag, size = 0x4, scoped, tag = 'scoped memory for tpu_custom_call.1']
    #allocation5 [shape = 'u8[32768]{0}', space=vmem, size = 0x8000, scoped, tag = 'input window, operand 1, single buffered']
    #allocation6 [shape = 's32[1]{0}', space=sflag, size = 0x4, scoped, tag = 'scoped memory for tpu_custom_call.1']
    #allocation7 [shape = 'u8[32768]{0}', space=vmem, size = 0x8000, scoped, tag = 'input window, operand 2, single buffered']
    #allocation8 [shape = 'u8[512]{0}', space=vmem, size = 0x400, scoped, tag = 'input window, operand 4, single buffered']
    #allocation9 [shape = 's32[1]{0}', space=sflag, size = 0x4, scoped, tag = 'scoped memory for tpu_custom_call.1']
    #allocation10 [shape = 'u8[32768]{0}', space=vmem, size = 0x8000, scoped, tag = 'input window, operand 5, single buffered']
    #allocation11 [shape = 'u8[512]{0}', space=vmem, size = 0x400, scoped, tag = 'input window, operand 6, single buffered']
    #allocation12 [shape = 's32[1]{0}', space=sflag, size = 0x4, scoped, tag = 'scoped memory for tpu_custom_call.1']
    #allocation13 [shape = 'u8[65536]{0}', space=vmem, size = 0x10000, scoped, tag = 'input window, operand 8, single buffered']
    #allocation14 [shape = 'u8[262144]{0}', space=vmem, size = 0x40000, scoped, tag = 'input window, operand 13, single buffered']
    #allocation15 [shape = 's32[1]{0}', space=sflag, size = 0x4, scoped, tag = 'scoped memory for tpu_custom_call.1']
    #allocation16 [shape = 'u8[131072]{0}', space=vmem, size = 0x20000, scoped, tag = 'input window, operand 16, single buffered']
    #allocation17 [shape = 'u8[8192]{0}', space=vmem, size = 0x2000, scoped, tag = 'output window, operand 0, single buffered']
    %23 = vsyncpa [#allocation3], 0
    %24 = vsyncpa [#allocation6], 0
    %25 = vsyncpa [#allocation9], 0
    %26 = vsyncpa [#allocation12], 0
    %27 = vsyncpa [#allocation15], 0
    %28 = vsyncpa [#allocation4], 0
    // Predicated region
    $region2: #{tpu_custom_call.1} parent=1 // pred_check
      _
    $region3: #{tpu_custom_call.1} parent=1 // pred_check_branch
      %30 = sbr.rel (0) target = $region5
    $region4: #{tpu_custom_call.1} parent=1 // pred_region
      %32 = vsyncadd [#allocation3], 0
      %s33 = sshll.u32 %s0, 4
      %s34 = int_to_ptr.hbm [resolvable:$true] %s33
      %s35 = sshll.u32 [#allocation2], 4
      %s36 = int_to_ptr.vmem [resolvable:$true] %s35
      %41 = dma.hbm_to_vmem [thread:$0]  %s34, 1024, %s36, [#allocation3], 64, 64, 4
    $region5: #{tpu_custom_call.1} parent=1 // pred_fallthru
      _
    // Predicated region
    $region6: #{tpu_custom_call.1} parent=1 // pred_check
      _
    $region7: #{tpu_custom_call.1} parent=1 // pred_check_branch
      %43 = sbr.rel (0) target = $region9
    $region8: #{tpu_custom_call.1} parent=1 // pred_region
      %45 = vsyncadd [#allocation6], 0
      %s46 = sshll.u32 %s1, 4
      %s47 = int_to_ptr.hbm [resolvable:$true] %s46
      %s48 = sshll.u32 [#allocation5], 4
      %s49 = int_to_ptr.vmem [resolvable:$true] %s48
      %54 = dma.hbm_to_vmem [thread:$0]  %s47, 1024, %s49, [#allocation6], 64, 64, 4
    $region9: #{tpu_custom_call.1} parent=1 // pred_fallthru
      _
    // Predicated region
    $region10: #{tpu_custom_call.1} parent=1 // pred_check
      _
    $region11: #{tpu_custom_call.1} parent=1 // pred_check_branch
      %56 = sbr.rel (0) target = $region13
    $region12: #{tpu_custom_call.1} parent=1 // pred_region
      %58 = vsyncadd [#allocation6], 0
      %s59 = sshll.u32 %s2, 4
      %s60 = int_to_ptr.hbm [resolvable:$true] %s59
      %s61 = sshll.u32 [#allocation7], 4
      %s62 = int_to_ptr.vmem [resolvable:$true] %s61
      %67 = dma.hbm_to_vmem [thread:$0]  %s60, 1024, %s62, [#allocation6], 64, 64, 4
    $region13: #{tpu_custom_call.1} parent=1 // pred_fallthru
      _
    // Predicated region
    $region14: #{tpu_custom_call.1} parent=1 // pred_check
      _
    $region15: #{tpu_custom_call.1} parent=1 // pred_check_branch
      %69 = sbr.rel (0) target = $region17
    $region16: #{tpu_custom_call.1} parent=1 // pred_region
      _
    $region17: #{tpu_custom_call.1} parent=1 // pred_fallthru
      _
    // Predicated region
    $region18: #{tpu_custom_call.1} parent=1 // pred_check
      _
    $region19: #{tpu_custom_call.1} parent=1 // pred_check_branch
      %71 = sbr.rel (0) target = $region21
    $region20: #{tpu_custom_call.1} parent=1 // pred_region
      %73 = vsyncadd [#allocation9], 0
      %s75 = sshll.u32 %s4, 4
      %s76 = int_to_ptr.hbm [resolvable:$true] %s75
      %s77 = sshll.u32 [#allocation8], 4
      %s78 = int_to_ptr.vmem [resolvable:$true] %s77
      %80 = dma.hbm_to_vmem [thread:$0]  %s76, 16, %s78, [#allocation9]
    $region21: #{tpu_custom_call.1} parent=1 // pred_fallthru
      _
    // Predicated region
    $region22: #{tpu_custom_call.1} parent=1 // pred_check
      _
    $region23: #{tpu_custom_call.1} parent=1 // pred_check_branch
      %82 = sbr.rel (0) target = $region25
    $region24: #{tpu_custom_call.1} parent=1 // pred_region
      %84 = vsyncadd [#allocation9], 0
      %s85 = sshll.u32 %s5, 4
      %s86 = int_to_ptr.hbm [resolvable:$true] %s85
      %s87 = sshll.u32 [#allocation10], 4
      %s88 = int_to_ptr.vmem [resolvable:$true] %s87
      %93 = dma.hbm_to_vmem [thread:$0]  %s86, 1024, %s88, [#allocation9], 64, 64, 4
    $region25: #{tpu_custom_call.1} parent=1 // pred_fallthru
      _
    // Predicated region
    $region26: #{tpu_custom_call.1} parent=1 // pred_check
      _
    $region27: #{tpu_custom_call.1} parent=1 // pred_check_branch
      %95 = sbr.rel (0) target = $region29
    $region28: #{tpu_custom_call.1} parent=1 // pred_region
      %97 = vsyncadd [#allocation12], 0
      %s99 = sshll.u32 %s6, 4
      %s100 = int_to_ptr.hbm [resolvable:$true] %s99
      %s101 = sshll.u32 [#allocation11], 4
      %s102 = int_to_ptr.vmem [resolvable:$true] %s101
      %104 = dma.hbm_to_vmem [thread:$0]  %s100, 16, %s102, [#allocation12]
    $region29: #{tpu_custom_call.1} parent=1 // pred_fallthru
      _
    // Predicated region
    $region30: #{tpu_custom_call.1} parent=1 // pred_check
      _
    $region31: #{tpu_custom_call.1} parent=1 // pred_check_branch
      %106 = sbr.rel (0) target = $region33
    $region32: #{tpu_custom_call.1} parent=1 // pred_region
      _
    $region33: #{tpu_custom_call.1} parent=1 // pred_fallthru
      _
    // Predicated region
    $region34: #{tpu_custom_call.1} parent=1 // pred_check
      _
    $region35: #{tpu_custom_call.1} parent=1 // pred_check_branch
      %108 = sbr.rel (0) target = $region37
    $region36: #{tpu_custom_call.1} parent=1 // pred_region
      %110 = vsyncadd [#allocation12], 0
      %s111 = sshll.u32 %s8, 4
      %s112 = int_to_ptr.hbm [resolvable:$true] %s111
      %s113 = sshll.u32 [#allocation13], 4
      %s114 = int_to_ptr.vmem [resolvable:$true] %s113
      %119 = dma.hbm_to_vmem [thread:$0]  %s112, 2048, %s114, [#allocation12], 128, 128, 8
    $region37: #{tpu_custom_call.1} parent=1 // pred_fallthru
      _
    // Predicated region
    $region38: #{tpu_custom_call.1} parent=1 // pred_check
      _
    $region39: #{tpu_custom_call.1} parent=1 // pred_check_branch
      %121 = sbr.rel (0) target = $region41
    $region40: #{tpu_custom_call.1} parent=1 // pred_region
      _
    $region41: #{tpu_custom_call.1} parent=1 // pred_fallthru
      _
    // Predicated region
    $region42: #{tpu_custom_call.1} parent=1 // pred_check
      _
    $region43: #{tpu_custom_call.1} parent=1 // pred_check_branch
      %123 = sbr.rel (0) target = $region45
    $region44: #{tpu_custom_call.1} parent=1 // pred_region
      _
    $region45: #{tpu_custom_call.1} parent=1 // pred_fallthru
      _
    // Predicated region
    $region46: #{tpu_custom_call.1} parent=1 // pred_check
      _
    $region47: #{tpu_custom_call.1} parent=1 // pred_check_branch
      %125 = sbr.rel (0) target = $region49
    $region48: #{tpu_custom_call.1} parent=1 // pred_region
      _
    $region49: #{tpu_custom_call.1} parent=1 // pred_fallthru
      _
    // Predicated region
    $region50: #{tpu_custom_call.1} parent=1 // pred_check
      _
    $region51: #{tpu_custom_call.1} parent=1 // pred_check_branch
      %127 = sbr.rel (0) target = $region53
    $region52: #{tpu_custom_call.1} parent=1 // pred_region
      _
    $region53: #{tpu_custom_call.1} parent=1 // pred_fallthru
      _
    // Predicated region
    $region54: #{tpu_custom_call.1} parent=1 // pred_check
      _
    $region55: #{tpu_custom_call.1} parent=1 // pred_check_branch
      %129 = sbr.rel (0) target = $region57
    $region56: #{tpu_custom_call.1} parent=1 // pred_region
      %131 = vsyncadd [#allocation15], 0
      %s132 = sshll.u32 %s13, 4
      %s133 = int_to_ptr.hbm [resolvable:$true] %s132
      %s134 = sshll.u32 [#allocation14], 4
      %s135 = int_to_ptr.vmem [resolvable:$true] %s134
      %140 = dma.hbm_to_vmem [thread:$0]  %s133, 8192, %s135, [#allocation15], 256, 256, 16
    $region57: #{tpu_custom_call.1} parent=1 // pred_fallthru
      _
    // Predicated region
    $region58: #{tpu_custom_call.1} parent=1 // pred_check
      _
    $region59: #{tpu_custom_call.1} parent=1 // pred_check_branch
      %142 = sbr.rel (0) target = $region61
    $region60: #{tpu_custom_call.1} parent=1 // pred_region
      _
    $region61: #{tpu_custom_call.1} parent=1 // pred_fallthru
      _
    // Predicated region
    $region62: #{tpu_custom_call.1} parent=1 // pred_check
      _
    $region63: #{tpu_custom_call.1} parent=1 // pred_check_branch
      %144 = sbr.rel (0) target = $region65
    $region64: #{tpu_custom_call.1} parent=1 // pred_region
      _
    $region65: #{tpu_custom_call.1} parent=1 // pred_fallthru
      _
    // Predicated region
    $region66: #{tpu_custom_call.1} parent=1 // pred_check
      _
    $region67: #{tpu_custom_call.1} parent=1 // pred_check_branch
      %146 = sbr.rel (0) target = $region69
    $region68: #{tpu_custom_call.1} parent=1 // pred_region
      %148 = vsyncadd [#allocation15], 0
      %s149 = sshll.u32 %s16, 4
      %s150 = int_to_ptr.hbm [resolvable:$true] %s149
      %s151 = sshll.u32 [#allocation16], 4
      %s152 = int_to_ptr.vmem [resolvable:$true] %s151
      %157 = dma.hbm_to_vmem [thread:$0]  %s150, 4096, %s152, [#allocation15], 64, 64, 4
    $region69: #{tpu_custom_call.1} parent=1 // pred_fallthru
      _
    // Predicated region
    $region70: #{tpu_custom_call.1} parent=1 // pred_check
      _
    $region71: #{tpu_custom_call.1} parent=1 // pred_check_branch
      %159 = sbr.rel (0) target = $region73
    $region72: #{tpu_custom_call.1} parent=1 // pred_region
      _
    $region73: #{tpu_custom_call.1} parent=1 // pred_fallthru
      _
    // Predicated region
    $region74: #{tpu_custom_call.1} parent=1 // pred_check
      _
    $region75: #{tpu_custom_call.1} parent=1 // pred_check_branch
      %161 = sbr.rel (0) target = $region77
    $region76: #{tpu_custom_call.1} parent=1 // pred_region
      %163 = dma.done [#allocation3], 1024
    $region77: #{tpu_custom_call.1} parent=1 // pred_fallthru
      _
    // Predicated region
    $region78: #{tpu_custom_call.1} parent=1 // pred_check
      _
    $region79: #{tpu_custom_call.1} parent=1 // pred_check_branch
      %165 = sbr.rel (0) target = $region81
    $region80: #{tpu_custom_call.1} parent=1 // pred_region
      %167 = dma.done [#allocation6], 1024
    $region81: #{tpu_custom_call.1} parent=1 // pred_fallthru
      _
    // Predicated region
    $region82: #{tpu_custom_call.1} parent=1 // pred_check
      _
    $region83: #{tpu_custom_call.1} parent=1 // pred_check_branch
      %169 = sbr.rel (0) target = $region85
    $region84: #{tpu_custom_call.1} parent=1 // pred_region
      %171 = dma.done [#allocation6], 1024
    $region85: #{tpu_custom_call.1} parent=1 // pred_fallthru
      _
    // Predicated region
    $region86: #{tpu_custom_call.1} parent=1 // pred_check
      _
    $region87: #{tpu_custom_call.1} parent=1 // pred_check_branch
      %173 = sbr.rel (0) target = $region89
    $region88: #{tpu_custom_call.1} parent=1 // pred_region
      %175 = dma.done [#allocation9], 16
    $region89: #{tpu_custom_call.1} parent=1 // pred_fallthru
      _
    // Predicated region
    $region90: #{tpu_custom_call.1} parent=1 // pred_check
      _
    $region91: #{tpu_custom_call.1} parent=1 // pred_check_branch
      %177 = sbr.rel (0) target = $region93
    $region92: #{tpu_custom_call.1} parent=1 // pred_region
      %179 = dma.done [#allocation9], 1024
    $region93: #{tpu_custom_call.1} parent=1 // pred_fallthru
      _
    // Predicated region
    $region94: #{tpu_custom_call.1} parent=1 // pred_check
      _
    $region95: #{tpu_custom_call.1} parent=1 // pred_check_branch
      %181 = sbr.rel (0) target = $region97
    $region96: #{tpu_custom_call.1} parent=1 // pred_region
      %183 = dma.done [#allocation12], 16
    $region97: #{tpu_custom_call.1} parent=1 // pred_fallthru
      _
    // Predicated region
    $region98: #{tpu_custom_call.1} parent=1 // pred_check
      _
    $region99: #{tpu_custom_call.1} parent=1 // pred_check_branch
      %185 = sbr.rel (0) target = $region101
    $region100: #{tpu_custom_call.1} parent=1 // pred_region
      %187 = dma.done [#allocation12], 2048
    $region101: #{tpu_custom_call.1} parent=1 // pred_fallthru
      _
    // Predicated region
    $region102: #{tpu_custom_call.1} parent=1 // pred_check
      _
    $region103: #{tpu_custom_call.1} parent=1 // pred_check_branch
      %189 = sbr.rel (0) target = $region105
    $region104: #{tpu_custom_call.1} parent=1 // pred_region
      %191 = dma.done [#allocation15], 8192
    $region105: #{tpu_custom_call.1} parent=1 // pred_fallthru
      _
    // Predicated region
    $region106: #{tpu_custom_call.1} parent=1 // pred_check
      _
    $region107: #{tpu_custom_call.1} parent=1 // pred_check_branch
      %193 = sbr.rel (0) target = $region109
    $region108: #{tpu_custom_call.1} parent=1 // pred_region
      %195 = dma.done [#allocation15], 4096
    $region109: #{tpu_custom_call.1} parent=1 // pred_fallthru
      _
    %v196 = vld [vmem:[#allocation2] sm:$0xf]
    %v197 = vld [vmem:[#allocation2 + $0x4] sm:$0xf]
    %v198 = vld [vmem:[#allocation2 + $0x8] sm:$0xf]
    %v199 = vld [vmem:[#allocation2 + $0xc] sm:$0xf]
    %v200 = vld [vmem:[#allocation2 + $0x10] sm:$0xf]
    %v201 = vld [vmem:[#allocation2 + $0x14] sm:$0xf]
    %v202 = vld [vmem:[#allocation2 + $0x18] sm:$0xf]
    %v203 = vld [vmem:[#allocation2 + $0x1c] sm:$0xf]
    %v204 = vld [vmem:[#allocation2 + $0x20] sm:$0xf]
    %v205 = vld [vmem:[#allocation2 + $0x24] sm:$0xf]
    %v206 = vld [vmem:[#allocation2 + $0x28] sm:$0xf]
    %v207 = vld [vmem:[#allocation2 + $0x2c] sm:$0xf]
    %v208 = vld [vmem:[#allocation2 + $0x30] sm:$0xf]
    %v209 = vld [vmem:[#allocation2 + $0x34] sm:$0xf]
    %v210 = vld [vmem:[#allocation2 + $0x38] sm:$0xf]
    %v211 = vld [vmem:[#allocation2 + $0x3c] sm:$0xf]
    %v212 = vld [vmem:[#allocation5] sm:$0xf]
    %v213 = vld [vmem:[#allocation5 + $0x4] sm:$0xf]
    %v214 = vld [vmem:[#allocation5 + $0x8] sm:$0xf]
    %v215 = vld [vmem:[#allocation5 + $0xc] sm:$0xf]
    %v216 = vld [vmem:[#allocation5 + $0x10] sm:$0xf]
    %v217 = vld [vmem:[#allocation5 + $0x14] sm:$0xf]
    %v218 = vld [vmem:[#allocation5 + $0x18] sm:$0xf]
    %v219 = vld [vmem:[#allocation5 + $0x1c] sm:$0xf]
    %v220 = vld [vmem:[#allocation5 + $0x20] sm:$0xf]
    %v221 = vld [vmem:[#allocation5 + $0x24] sm:$0xf]
    %v222 = vld [vmem:[#allocation5 + $0x28] sm:$0xf]
    %v223 = vld [vmem:[#allocation5 + $0x2c] sm:$0xf]
    %v224 = vld [vmem:[#allocation5 + $0x30] sm:$0xf]
    %v225 = vld [vmem:[#allocation5 + $0x34] sm:$0xf]
    %v226 = vld [vmem:[#allocation5 + $0x38] sm:$0xf]
    %v227 = vld [vmem:[#allocation5 + $0x3c] sm:$0xf]
    %v244 = vunpack.c.l.b16 %v196
    %v245 = vunpack.c.l.b16 %v197
    %v246 = vunpack.c.l.b16 %v198
    %v247 = vunpack.c.l.b16 %v199
    %v248 = vunpack.c.l.b16 %v200
    %v249 = vunpack.c.l.b16 %v201
    %v250 = vunpack.c.l.b16 %v202
    %v251 = vunpack.c.l.b16 %v203
    %v252 = vunpack.c.l.b16 %v204
    %v253 = vunpack.c.l.b16 %v205
    %v254 = vunpack.c.l.b16 %v206
    %v255 = vunpack.c.l.b16 %v207
    %v256 = vunpack.c.l.b16 %v208
    %v257 = vunpack.c.l.b16 %v209
    %v258 = vunpack.c.l.b16 %v210
    %v259 = vunpack.c.l.b16 %v211
    %v260 = vpack.c.b16 %v245, %v244
    %v261 = vpack.c.b16 %v247, %v246
    %v262 = vpack.c.b16 %v249, %v248
    %v263 = vpack.c.b16 %v251, %v250
    %v264 = vpack.c.b16 %v253, %v252
    %v265 = vpack.c.b16 %v255, %v254
    %v266 = vpack.c.b16 %v257, %v256
    %v267 = vpack.c.b16 %v259, %v258
    %v292 = vunpack.c.l.b16 %v212
    %v293 = vunpack.c.l.b16 %v213
    %v294 = vunpack.c.l.b16 %v214
    %v295 = vunpack.c.l.b16 %v215
    %v296 = vunpack.c.l.b16 %v216
    %v297 = vunpack.c.l.b16 %v217
    %v298 = vunpack.c.l.b16 %v218
    %v299 = vunpack.c.l.b16 %v219
    %v300 = vunpack.c.l.b16 %v220
    %v301 = vunpack.c.l.b16 %v221
    %v302 = vunpack.c.l.b16 %v222
    %v303 = vunpack.c.l.b16 %v223
    %v304 = vunpack.c.l.b16 %v224
    %v305 = vunpack.c.l.b16 %v225
    %v306 = vunpack.c.l.b16 %v226
    %v307 = vunpack.c.l.b16 %v227
    %v308 = vpack.c.b16 %v293, %v292
    %v309 = vpack.c.b16 %v295, %v294
    %v310 = vpack.c.b16 %v297, %v296
    %v311 = vpack.c.b16 %v299, %v298
    %v312 = vpack.c.b16 %v301, %v300
    %v313 = vpack.c.b16 %v303, %v302
    %v314 = vpack.c.b16 %v305, %v304
    %v315 = vpack.c.b16 %v307, %v306
    %324 = vmatpush.bf16.msra.mxu0 %v315
    %325 = vmatpush.bf16.msra.mxu0 %v314
    %326 = vmatpush.bf16.msra.mxu0 %v313
    %327 = vmatpush.bf16.msra.mxu0 %v312
    %328 = vmatpush.bf16.msra.mxu0 %v311
    %329 = vmatpush.bf16.msra.mxu0 %v310
    %330 = vmatpush.bf16.msra.mxu0 %v309
    %331 = vmatpush.bf16.msra.mxu0 %v308
    %332 = vmatmul.bf16.gmra.mxu0 %v260
    %v333 = vpop.f32.mrf.mxu0
    %v334 = vadd.f32 0.0, %v333
    %v335 = vpop.f32.mrf.mxu0
    %v336 = vadd.f32 0.0, %v335
    %337 = vmatmul.bf16.gmra.mxu0 %v261
    %v338 = vpop.f32.mrf.mxu0
    %v339 = vadd.f32 0.0, %v338
    %v340 = vpop.f32.mrf.mxu0
    %v341 = vadd.f32 0.0, %v340
    %342 = vmatmul.bf16.gmra.mxu0 %v262
    %v343 = vpop.f32.mrf.mxu0
    %v344 = vadd.f32 0.0, %v343
    %v345 = vpop.f32.mrf.mxu0
    %v346 = vadd.f32 0.0, %v345
    %347 = vmatmul.bf16.gmra.mxu0 %v263
    %v348 = vpop.f32.mrf.mxu0
    %v349 = vadd.f32 0.0, %v348
    %v350 = vpop.f32.mrf.mxu0
    %v351 = vadd.f32 0.0, %v350
    %352 = vmatmul.bf16.gmra.mxu0 %v264
    %v353 = vpop.f32.mrf.mxu0
    %v354 = vadd.f32 0.0, %v353
    %v355 = vpop.f32.mrf.mxu0
    %v356 = vadd.f32 0.0, %v355
    %357 = vmatmul.bf16.gmra.mxu0 %v265
    %v358 = vpop.f32.mrf.mxu0
    %v359 = vadd.f32 0.0, %v358
    %v360 = vpop.f32.mrf.mxu0
    %v361 = vadd.f32 0.0, %v360
    %362 = vmatmul.bf16.gmra.mxu0 %v266
    %v363 = vpop.f32.mrf.mxu0
    %v364 = vadd.f32 0.0, %v363
    %v365 = vpop.f32.mrf.mxu0
    %v366 = vadd.f32 0.0, %v365
    %367 = vmatmul.bf16.gmra.mxu0 %v267
    %v368 = vpop.f32.mrf.mxu0
    %v369 = vadd.f32 0.0, %v368
    %v370 = vpop.f32.mrf.mxu0
    %v371 = vadd.f32 0.0, %v370
    %372 = vdwg.mxu0
    %v373 = vpack.c.bf16 %v336, %v334
    %v374 = vpack.c.bf16 %v341, %v339
    %v375 = vpack.c.bf16 %v346, %v344
    %v376 = vpack.c.bf16 %v351, %v349
    %v377 = vpack.c.bf16 %v356, %v354
    %v378 = vpack.c.bf16 %v361, %v359
    %v379 = vpack.c.bf16 %v366, %v364
    %v380 = vpack.c.bf16 %v371, %v369
    %v381 = vld [vmem:[#allocation7] sm:$0xf]
    %v382 = vld [vmem:[#allocation7 + $0x4] sm:$0xf]
    %v383 = vld [vmem:[#allocation7 + $0x8] sm:$0xf]
    %v384 = vld [vmem:[#allocation7 + $0xc] sm:$0xf]
    %v385 = vld [vmem:[#allocation7 + $0x10] sm:$0xf]
    %v386 = vld [vmem:[#allocation7 + $0x14] sm:$0xf]
    %v387 = vld [vmem:[#allocation7 + $0x18] sm:$0xf]
    %v388 = vld [vmem:[#allocation7 + $0x1c] sm:$0xf]
    %v389 = vld [vmem:[#allocation7 + $0x20] sm:$0xf]
    %v390 = vld [vmem:[#allocation7 + $0x24] sm:$0xf]
    %v391 = vld [vmem:[#allocation7 + $0x28] sm:$0xf]
    %v392 = vld [vmem:[#allocation7 + $0x2c] sm:$0xf]
    %v393 = vld [vmem:[#allocation7 + $0x30] sm:$0xf]
    %v394 = vld [vmem:[#allocation7 + $0x34] sm:$0xf]
    %v395 = vld [vmem:[#allocation7 + $0x38] sm:$0xf]
    %v396 = vld [vmem:[#allocation7 + $0x3c] sm:$0xf]
    %v413 = vunpack.c.l.b16 %v381
    %v414 = vunpack.c.l.b16 %v382
    %v415 = vunpack.c.l.b16 %v383
    %v416 = vunpack.c.l.b16 %v384
    %v417 = vunpack.c.l.b16 %v385
    %v418 = vunpack.c.l.b16 %v386
    %v419 = vunpack.c.l.b16 %v387
    %v420 = vunpack.c.l.b16 %v388
    %v421 = vunpack.c.l.b16 %v389
    %v422 = vunpack.c.l.b16 %v390
    %v423 = vunpack.c.l.b16 %v391
    %v424 = vunpack.c.l.b16 %v392
    %v425 = vunpack.c.l.b16 %v393
    %v426 = vunpack.c.l.b16 %v394
    %v427 = vunpack.c.l.b16 %v395
    %v428 = vunpack.c.l.b16 %v396
    %v429 = vpack.c.b16 %v414, %v413
    %v430 = vpack.c.b16 %v416, %v415
    %v431 = vpack.c.b16 %v418, %v417
    %v432 = vpack.c.b16 %v420, %v419
    %v433 = vpack.c.b16 %v422, %v421
    %v434 = vpack.c.b16 %v424, %v423
    %v435 = vpack.c.b16 %v426, %v425
    %v436 = vpack.c.b16 %v428, %v427
    %445 = vmatpush.bf16.msra.mxu0 %v436
    %446 = vmatpush.bf16.msra.mxu0 %v435
    %447 = vmatpush.bf16.msra.mxu0 %v434
    %448 = vmatpush.bf16.msra.mxu0 %v433
    %449 = vmatpush.bf16.msra.mxu0 %v432
    %450 = vmatpush.bf16.msra.mxu0 %v431
    %451 = vmatpush.bf16.msra.mxu0 %v430
    %452 = vmatpush.bf16.msra.mxu0 %v429
    %453 = vmatmul.bf16.gmra.mxu0 %v373
    %v454 = vpop.f32.mrf.mxu0
    %v455 = vadd.f32 0.0, %v454
    %v456 = vpop.f32.mrf.mxu0
    %v457 = vadd.f32 0.0, %v456
    %458 = vmatmul.bf16.gmra.mxu0 %v374
    %v459 = vpop.f32.mrf.mxu0
    %v460 = vadd.f32 0.0, %v459
    %v461 = vpop.f32.mrf.mxu0
    %v462 = vadd.f32 0.0, %v461
    %463 = vmatmul.bf16.gmra.mxu0 %v375
    %v464 = vpop.f32.mrf.mxu0
    %v465 = vadd.f32 0.0, %v464
    %v466 = vpop.f32.mrf.mxu0
    %v467 = vadd.f32 0.0, %v466
    %468 = vmatmul.bf16.gmra.mxu0 %v376
    %v469 = vpop.f32.mrf.mxu0
    %v470 = vadd.f32 0.0, %v469
    %v471 = vpop.f32.mrf.mxu0
    %v472 = vadd.f32 0.0, %v471
    %473 = vmatmul.bf16.gmra.mxu0 %v377
    %v474 = vpop.f32.mrf.mxu0
    %v475 = vadd.f32 0.0, %v474
    %v476 = vpop.f32.mrf.mxu0
    %v477 = vadd.f32 0.0, %v476
    %478 = vmatmul.bf16.gmra.mxu0 %v378
    %v479 = vpop.f32.mrf.mxu0
    %v480 = vadd.f32 0.0, %v479
    %v481 = vpop.f32.mrf.mxu0
    %v482 = vadd.f32 0.0, %v481
    %483 = vmatmul.bf16.gmra.mxu0 %v379
    %v484 = vpop.f32.mrf.mxu0
    %v485 = vadd.f32 0.0, %v484
    %v486 = vpop.f32.mrf.mxu0
    %v487 = vadd.f32 0.0, %v486
    %488 = vmatmul.bf16.gmra.mxu0 %v380
    %v489 = vpop.f32.mrf.mxu0
    %v490 = vadd.f32 0.0, %v489
    %v491 = vpop.f32.mrf.mxu0
    %v492 = vadd.f32 0.0, %v491
    %493 = vdwg.mxu0
    %v494 = vld [vmem:[%s3] sm:$0x1]
    %v496 = vperm.slane %v494, 0
    %v498 = vmul.f32 %v455, %v496
    %v499 = vmul.f32 %v457, %v496
    %v500 = vmul.f32 %v460, %v496
    %v501 = vmul.f32 %v462, %v496
    %v502 = vmul.f32 %v465, %v496
    %v503 = vmul.f32 %v467, %v496
    %v504 = vmul.f32 %v470, %v496
    %v505 = vmul.f32 %v472, %v496
    %v506 = vmul.f32 %v475, %v496
    %v507 = vmul.f32 %v477, %v496
    %v508 = vmul.f32 %v480, %v496
    %v509 = vmul.f32 %v482, %v496
    %v510 = vmul.f32 %v485, %v496
    %v511 = vmul.f32 %v487, %v496
    %v512 = vmul.f32 %v490, %v496
    %v513 = vmul.f32 %v492, %v496
    %v514 = vld [vmem:[#allocation8] sm:$0x1]
    %v516 = vperm.slane %v514, 0
    %v518 = vadd.f32 %v498, %v516
    %v519 = vadd.f32 %v499, %v516
    %v520 = vadd.f32 %v500, %v516
    %v521 = vadd.f32 %v501, %v516
    %v522 = vadd.f32 %v502, %v516
    %v523 = vadd.f32 %v503, %v516
    %v524 = vadd.f32 %v504, %v516
    %v525 = vadd.f32 %v505, %v516
    %v526 = vadd.f32 %v506, %v516
    %v527 = vadd.f32 %v507, %v516
    %v528 = vadd.f32 %v508, %v516
    %v529 = vadd.f32 %v509, %v516
    %v530 = vadd.f32 %v510, %v516
    %v531 = vadd.f32 %v511, %v516
    %v532 = vadd.f32 %v512, %v516
    %v533 = vadd.f32 %v513, %v516
    %v534 = vmax.f32 %v518, 0.0
    %v535 = vmax.f32 %v519, 0.0
    %v536 = vmax.f32 %v520, 0.0
    %v537 = vmax.f32 %v521, 0.0
    %v538 = vmax.f32 %v522, 0.0
    %v539 = vmax.f32 %v523, 0.0
    %v540 = vmax.f32 %v524, 0.0
    %v541 = vmax.f32 %v525, 0.0
    %v542 = vmax.f32 %v526, 0.0
    %v543 = vmax.f32 %v527, 0.0
    %v544 = vmax.f32 %v528, 0.0
    %v545 = vmax.f32 %v529, 0.0
    %v546 = vmax.f32 %v530, 0.0
    %v547 = vmax.f32 %v531, 0.0
    %v548 = vmax.f32 %v532, 0.0
    %v549 = vmax.f32 %v533, 0.0
    %v550 = vpack.c.bf16 %v535, %v534
    %v551 = vpack.c.bf16 %v537, %v536
    %v552 = vpack.c.bf16 %v539, %v538
    %v553 = vpack.c.bf16 %v541, %v540
    %v554 = vpack.c.bf16 %v543, %v542
    %v555 = vpack.c.bf16 %v545, %v544
    %v556 = vpack.c.bf16 %v547, %v546
    %v557 = vpack.c.bf16 %v549, %v548
    %558 = vmatpush.bf16.msra.mxu0 %v557
    %559 = vmatpush.bf16.msra.mxu0 %v556
    %560 = vmatpush.bf16.msra.mxu0 %v555
    %561 = vmatpush.bf16.msra.mxu0 %v554
    %562 = vmatpush.bf16.msra.mxu0 %v553
    %563 = vmatpush.bf16.msra.mxu0 %v552
    %564 = vmatpush.bf16.msra.mxu0 %v551
    %565 = vmatpush.bf16.msra.mxu0 %v550
    %566 = vmatmul.bf16.gmra.mxu0 %v260
    %v567 = vpop.f32.mrf.mxu0
    %v568 = vadd.f32 0.0, %v567
    %v569 = vpop.f32.mrf.mxu0
    %v570 = vadd.f32 0.0, %v569
    %571 = vmatmul.bf16.gmra.mxu0 %v261
    %v572 = vpop.f32.mrf.mxu0
    %v573 = vadd.f32 0.0, %v572
    %v574 = vpop.f32.mrf.mxu0
    %v575 = vadd.f32 0.0, %v574
    %576 = vmatmul.bf16.gmra.mxu0 %v262
    %v577 = vpop.f32.mrf.mxu0
    %v578 = vadd.f32 0.0, %v577
    %v579 = vpop.f32.mrf.mxu0
    %v580 = vadd.f32 0.0, %v579
    %581 = vmatmul.bf16.gmra.mxu0 %v263
    %v582 = vpop.f32.mrf.mxu0
    %v583 = vadd.f32 0.0, %v582
    %v584 = vpop.f32.mrf.mxu0
    %v585 = vadd.f32 0.0, %v584
    %586 = vmatmul.bf16.gmra.mxu0 %v264
    %v587 = vpop.f32.mrf.mxu0
    %v588 = vadd.f32 0.0, %v587
    %v589 = vpop.f32.mrf.mxu0
    %v590 = vadd.f32 0.0, %v589
    %591 = vmatmul.bf16.gmra.mxu0 %v265
    %v592 = vpop.f32.mrf.mxu0
    %v593 = vadd.f32 0.0, %v592
    %v594 = vpop.f32.mrf.mxu0
    %v595 = vadd.f32 0.0, %v594
    %596 = vmatmul.bf16.gmra.mxu0 %v266
    %v597 = vpop.f32.mrf.mxu0
    %v598 = vadd.f32 0.0, %v597
    %v599 = vpop.f32.mrf.mxu0
    %v600 = vadd.f32 0.0, %v599
    %601 = vmatmul.bf16.gmra.mxu0 %v267
    %v602 = vpop.f32.mrf.mxu0
    %v603 = vadd.f32 0.0, %v602
    %v604 = vpop.f32.mrf.mxu0
    %v605 = vadd.f32 0.0, %v604
    %606 = vdwg.mxu0
    %v607 = vpack.c.bf16 %v570, %v568
    %v608 = vpack.c.bf16 %v575, %v573
    %v609 = vpack.c.bf16 %v580, %v578
    %v610 = vpack.c.bf16 %v585, %v583
    %v611 = vpack.c.bf16 %v590, %v588
    %v612 = vpack.c.bf16 %v595, %v593
    %v613 = vpack.c.bf16 %v600, %v598
    %v614 = vpack.c.bf16 %v605, %v603
    %v615 = vld [vmem:[#allocation10] sm:$0xf]
    %v616 = vld [vmem:[#allocation10 + $0x4] sm:$0xf]
    %v617 = vld [vmem:[#allocation10 + $0x8] sm:$0xf]
    %v618 = vld [vmem:[#allocation10 + $0xc] sm:$0xf]
    %v619 = vld [vmem:[#allocation10 + $0x10] sm:$0xf]
    %v620 = vld [vmem:[#allocation10 + $0x14] sm:$0xf]
    %v621 = vld [vmem:[#allocation10 + $0x18] sm:$0xf]
    %v622 = vld [vmem:[#allocation10 + $0x1c] sm:$0xf]
    %v623 = vld [vmem:[#allocation10 + $0x20] sm:$0xf]
    %v624 = vld [vmem:[#allocation10 + $0x24] sm:$0xf]
    %v625 = vld [vmem:[#allocation10 + $0x28] sm:$0xf]
    %v626 = vld [vmem:[#allocation10 + $0x2c] sm:$0xf]
    %v627 = vld [vmem:[#allocation10 + $0x30] sm:$0xf]
    %v628 = vld [vmem:[#allocation10 + $0x34] sm:$0xf]
    %v629 = vld [vmem:[#allocation10 + $0x38] sm:$0xf]
    %v630 = vld [vmem:[#allocation10 + $0x3c] sm:$0xf]
    %v647 = vunpack.c.l.b16 %v615
    %v648 = vunpack.c.l.b16 %v616
    %v649 = vunpack.c.l.b16 %v617
    %v650 = vunpack.c.l.b16 %v618
    %v651 = vunpack.c.l.b16 %v619
    %v652 = vunpack.c.l.b16 %v620
    %v653 = vunpack.c.l.b16 %v621
    %v654 = vunpack.c.l.b16 %v622
    %v655 = vunpack.c.l.b16 %v623
    %v656 = vunpack.c.l.b16 %v624
    %v657 = vunpack.c.l.b16 %v625
    %v658 = vunpack.c.l.b16 %v626
    %v659 = vunpack.c.l.b16 %v627
    %v660 = vunpack.c.l.b16 %v628
    %v661 = vunpack.c.l.b16 %v629
    %v662 = vunpack.c.l.b16 %v630
    %v663 = vpack.c.b16 %v648, %v647
    %v664 = vpack.c.b16 %v650, %v649
    %v665 = vpack.c.b16 %v652, %v651
    %v666 = vpack.c.b16 %v654, %v653
    %v667 = vpack.c.b16 %v656, %v655
    %v668 = vpack.c.b16 %v658, %v657
    %v669 = vpack.c.b16 %v660, %v659
    %v670 = vpack.c.b16 %v662, %v661
    %679 = vmatpush.bf16.msra.mxu0 %v670
    %680 = vmatpush.bf16.msra.mxu0 %v669
    %681 = vmatpush.bf16.msra.mxu0 %v668
    %682 = vmatpush.bf16.msra.mxu0 %v667
    %683 = vmatpush.bf16.msra.mxu0 %v666
    %684 = vmatpush.bf16.msra.mxu0 %v665
    %685 = vmatpush.bf16.msra.mxu0 %v664
    %686 = vmatpush.bf16.msra.mxu0 %v663
    %687 = vmatmul.bf16.gmra.mxu0 %v607
    %v688 = vpop.f32.mrf.mxu0
    %v689 = vadd.f32 0.0, %v688
    %v690 = vpop.f32.mrf.mxu0
    %v691 = vadd.f32 0.0, %v690
    %692 = vmatmul.bf16.gmra.mxu0 %v608
    %v693 = vpop.f32.mrf.mxu0
    %v694 = vadd.f32 0.0, %v693
    %v695 = vpop.f32.mrf.mxu0
    %v696 = vadd.f32 0.0, %v695
    %697 = vmatmul.bf16.gmra.mxu0 %v609
    %v698 = vpop.f32.mrf.mxu0
    %v699 = vadd.f32 0.0, %v698
    %v700 = vpop.f32.mrf.mxu0
    %v701 = vadd.f32 0.0, %v700
    %702 = vmatmul.bf16.gmra.mxu0 %v610
    %v703 = vpop.f32.mrf.mxu0
    %v704 = vadd.f32 0.0, %v703
    %v705 = vpop.f32.mrf.mxu0
    %v706 = vadd.f32 0.0, %v705
    %707 = vmatmul.bf16.gmra.mxu0 %v611
    %v708 = vpop.f32.mrf.mxu0
    %v709 = vadd.f32 0.0, %v708
    %v710 = vpop.f32.mrf.mxu0
    %v711 = vadd.f32 0.0, %v710
    %712 = vmatmul.bf16.gmra.mxu0 %v612
    %v713 = vpop.f32.mrf.mxu0
    %v714 = vadd.f32 0.0, %v713
    %v715 = vpop.f32.mrf.mxu0
    %v716 = vadd.f32 0.0, %v715
    %717 = vmatmul.bf16.gmra.mxu0 %v613
    %v718 = vpop.f32.mrf.mxu0
    %v719 = vadd.f32 0.0, %v718
    %v720 = vpop.f32.mrf.mxu0
    %v721 = vadd.f32 0.0, %v720
    %722 = vmatmul.bf16.gmra.mxu0 %v614
    %v723 = vpop.f32.mrf.mxu0
    %v724 = vadd.f32 0.0, %v723
    %v725 = vpop.f32.mrf.mxu0
    %v726 = vadd.f32 0.0, %v725
    %727 = vdwg.mxu0
    %v728 = vld [vmem:[#allocation11] sm:$0x1]
    %v730 = vperm.slane %v728, 0
    %v732 = vmul.f32 %v689, %v730
    %v733 = vmul.f32 %v691, %v730
    %v734 = vmul.f32 %v694, %v730
    %v735 = vmul.f32 %v696, %v730
    %v736 = vmul.f32 %v699, %v730
    %v737 = vmul.f32 %v701, %v730
    %v738 = vmul.f32 %v704, %v730
    %v739 = vmul.f32 %v706, %v730
    %v740 = vmul.f32 %v709, %v730
    %v741 = vmul.f32 %v711, %v730
    %v742 = vmul.f32 %v714, %v730
    %v743 = vmul.f32 %v716, %v730
    %v744 = vmul.f32 %v719, %v730
    %v745 = vmul.f32 %v721, %v730
    %v746 = vmul.f32 %v724, %v730
    %v747 = vmul.f32 %v726, %v730
    %v748 = vld [vmem:[%s7] sm:$0x1]
    %v750 = vperm.slane %v748, 0
    %v752 = vadd.f32 %v732, %v750
    %v753 = vadd.f32 %v733, %v750
    %v754 = vadd.f32 %v734, %v750
    %v755 = vadd.f32 %v735, %v750
    %v756 = vadd.f32 %v736, %v750
    %v757 = vadd.f32 %v737, %v750
    %v758 = vadd.f32 %v738, %v750
    %v759 = vadd.f32 %v739, %v750
    %v760 = vadd.f32 %v740, %v750
    %v761 = vadd.f32 %v741, %v750
    %v762 = vadd.f32 %v742, %v750
    %v763 = vadd.f32 %v743, %v750
    %v764 = vadd.f32 %v744, %v750
    %v765 = vadd.f32 %v745, %v750
    %v766 = vadd.f32 %v746, %v750
    %v767 = vadd.f32 %v747, %v750
    %v768 = vmax.f32 %v752, 0.0
    %v769 = vmax.f32 %v753, 0.0
    %v770 = vmax.f32 %v754, 0.0
    %v771 = vmax.f32 %v755, 0.0
    %v772 = vmax.f32 %v756, 0.0
    %v773 = vmax.f32 %v757, 0.0
    %v774 = vmax.f32 %v758, 0.0
    %v775 = vmax.f32 %v759, 0.0
    %v776 = vmax.f32 %v760, 0.0
    %v777 = vmax.f32 %v761, 0.0
    %v778 = vmax.f32 %v762, 0.0
    %v779 = vmax.f32 %v763, 0.0
    %v780 = vmax.f32 %v764, 0.0
    %v781 = vmax.f32 %v765, 0.0
    %v782 = vmax.f32 %v766, 0.0
    %v783 = vmax.f32 %v767, 0.0
    %v784 = vpack.c.bf16 %v769, %v768
    %v785 = vpack.c.bf16 %v771, %v770
    %v786 = vpack.c.bf16 %v773, %v772
    %v787 = vpack.c.bf16 %v775, %v774
    %v788 = vpack.c.bf16 %v777, %v776
    %v789 = vpack.c.bf16 %v779, %v778
    %v790 = vpack.c.bf16 %v781, %v780
    %v791 = vpack.c.bf16 %v783, %v782
    %792 = vmatpush.bf16.msra.mxu0 %v791
    %793 = vmatpush.bf16.msra.mxu0 %v790
    %794 = vmatpush.bf16.msra.mxu0 %v789
    %795 = vmatpush.bf16.msra.mxu0 %v788
    %796 = vmatpush.bf16.msra.mxu0 %v787
    %797 = vmatpush.bf16.msra.mxu0 %v786
    %798 = vmatpush.bf16.msra.mxu0 %v785
    %799 = vmatpush.bf16.msra.mxu0 %v784
    %800 = vmatmul.bf16.gmra.mxu0 %v260
    %v801 = vpop.f32.mrf.mxu0
    %v802 = vadd.f32 0.0, %v801
    %v803 = vpop.f32.mrf.mxu0
    %v804 = vadd.f32 0.0, %v803
    %805 = vmatmul.bf16.gmra.mxu0 %v261
    %v806 = vpop.f32.mrf.mxu0
    %v807 = vadd.f32 0.0, %v806
    %v808 = vpop.f32.mrf.mxu0
    %v809 = vadd.f32 0.0, %v808
    %810 = vmatmul.bf16.gmra.mxu0 %v262
    %v811 = vpop.f32.mrf.mxu0
    %v812 = vadd.f32 0.0, %v811
    %v813 = vpop.f32.mrf.mxu0
    %v814 = vadd.f32 0.0, %v813
    %815 = vmatmul.bf16.gmra.mxu0 %v263
    %v816 = vpop.f32.mrf.mxu0
    %v817 = vadd.f32 0.0, %v816
    %v818 = vpop.f32.mrf.mxu0
    %v819 = vadd.f32 0.0, %v818
    %820 = vmatmul.bf16.gmra.mxu0 %v264
    %v821 = vpop.f32.mrf.mxu0
    %v822 = vadd.f32 0.0, %v821
    %v823 = vpop.f32.mrf.mxu0
    %v824 = vadd.f32 0.0, %v823
    %825 = vmatmul.bf16.gmra.mxu0 %v265
    %v826 = vpop.f32.mrf.mxu0
    %v827 = vadd.f32 0.0, %v826
    %v828 = vpop.f32.mrf.mxu0
    %v829 = vadd.f32 0.0, %v828
    %830 = vmatmul.bf16.gmra.mxu0 %v266
    %v831 = vpop.f32.mrf.mxu0
    %v832 = vadd.f32 0.0, %v831
    %v833 = vpop.f32.mrf.mxu0
    %v834 = vadd.f32 0.0, %v833
    %835 = vmatmul.bf16.gmra.mxu0 %v267
    %v836 = vpop.f32.mrf.mxu0
    %v837 = vadd.f32 0.0, %v836
    %v838 = vpop.f32.mrf.mxu0
    %v839 = vadd.f32 0.0, %v838
    %840 = vdwg.mxu0
    %v841 = vpack.c.bf16 %v804, %v802
    %v842 = vpack.c.bf16 %v809, %v807
    %v843 = vpack.c.bf16 %v814, %v812
    %v844 = vpack.c.bf16 %v819, %v817
    %v845 = vpack.c.bf16 %v824, %v822
    %v846 = vpack.c.bf16 %v829, %v827
    %v847 = vpack.c.bf16 %v834, %v832
    %v848 = vpack.c.bf16 %v839, %v837
    %v849 = vld [vmem:[#allocation13] sm:$0xff]
    %v850 = vld [vmem:[#allocation13 + $0x8] sm:$0xff]
    %v851 = vld [vmem:[#allocation13 + $0x10] sm:$0xff]
    %v852 = vld [vmem:[#allocation13 + $0x18] sm:$0xff]
    %v853 = vld [vmem:[#allocation13 + $0x20] sm:$0xff]
    %v854 = vld [vmem:[#allocation13 + $0x28] sm:$0xff]
    %v855 = vld [vmem:[#allocation13 + $0x30] sm:$0xff]
    %v856 = vld [vmem:[#allocation13 + $0x38] sm:$0xff]
    %v857 = vld [vmem:[#allocation13 + $0x40] sm:$0xff]
    %v858 = vld [vmem:[#allocation13 + $0x48] sm:$0xff]
    %v859 = vld [vmem:[#allocation13 + $0x50] sm:$0xff]
    %v860 = vld [vmem:[#allocation13 + $0x58] sm:$0xff]
    %v861 = vld [vmem:[#allocation13 + $0x60] sm:$0xff]
    %v862 = vld [vmem:[#allocation13 + $0x68] sm:$0xff]
    %v863 = vld [vmem:[#allocation13 + $0x70] sm:$0xff]
    %v864 = vld [vmem:[#allocation13 + $0x78] sm:$0xff]
    %v881 = vunpack.c.l.b16 %v849
    %v882 = vunpack.c.h.b16 %v849
    %v883 = vunpack.c.l.b16 %v850
    %v884 = vunpack.c.h.b16 %v850
    %v885 = vunpack.c.l.b16 %v851
    %v886 = vunpack.c.h.b16 %v851
    %v887 = vunpack.c.l.b16 %v852
    %v888 = vunpack.c.h.b16 %v852
    %v889 = vunpack.c.l.b16 %v853
    %v890 = vunpack.c.h.b16 %v853
    %v891 = vunpack.c.l.b16 %v854
    %v892 = vunpack.c.h.b16 %v854
    %v893 = vunpack.c.l.b16 %v855
    %v894 = vunpack.c.h.b16 %v855
    %v895 = vunpack.c.l.b16 %v856
    %v896 = vunpack.c.h.b16 %v856
    %v897 = vunpack.c.l.b16 %v857
    %v898 = vunpack.c.h.b16 %v857
    %v899 = vunpack.c.l.b16 %v858
    %v900 = vunpack.c.h.b16 %v858
    %v901 = vunpack.c.l.b16 %v859
    %v902 = vunpack.c.h.b16 %v859
    %v903 = vunpack.c.l.b16 %v860
    %v904 = vunpack.c.h.b16 %v860
    %v905 = vunpack.c.l.b16 %v861
    %v906 = vunpack.c.h.b16 %v861
    %v907 = vunpack.c.l.b16 %v862
    %v908 = vunpack.c.h.b16 %v862
    %v909 = vunpack.c.l.b16 %v863
    %v910 = vunpack.c.h.b16 %v863
    %v911 = vunpack.c.l.b16 %v864
    %v912 = vunpack.c.h.b16 %v864
    %v913 = vpack.c.b16 %v883, %v881
    %v914 = vpack.c.b16 %v884, %v882
    %v915 = vpack.c.b16 %v887, %v885
    %v916 = vpack.c.b16 %v888, %v886
    %v917 = vpack.c.b16 %v891, %v889
    %v918 = vpack.c.b16 %v892, %v890
    %v919 = vpack.c.b16 %v895, %v893
    %v920 = vpack.c.b16 %v896, %v894
    %v921 = vpack.c.b16 %v899, %v897
    %v922 = vpack.c.b16 %v900, %v898
    %v923 = vpack.c.b16 %v903, %v901
    %v924 = vpack.c.b16 %v904, %v902
    %v925 = vpack.c.b16 %v907, %v905
    %v926 = vpack.c.b16 %v908, %v906
    %v927 = vpack.c.b16 %v911, %v909
    %v928 = vpack.c.b16 %v912, %v910
    %945 = vmatpush.bf16.msra.mxu0 %v927
    %946 = vmatpush.bf16.msra.mxu0 %v925
    %947 = vmatpush.bf16.msra.mxu0 %v923
    %948 = vmatpush.bf16.msra.mxu0 %v921
    %949 = vmatpush.bf16.msra.mxu0 %v919
    %950 = vmatpush.bf16.msra.mxu0 %v917
    %951 = vmatpush.bf16.msra.mxu0 %v915
    %952 = vmatpush.bf16.msra.mxu0 %v913
    %953 = vmatmul.bf16.gmra.mxu0 %v841
    %v954 = vpop.f32.mrf.mxu0
    %v955 = vadd.f32 0.0, %v954
    %v956 = vpop.f32.mrf.mxu0
    %v957 = vadd.f32 0.0, %v956
    %958 = vmatmul.bf16.gmra.mxu0 %v842
    %v959 = vpop.f32.mrf.mxu0
    %v960 = vadd.f32 0.0, %v959
    %v961 = vpop.f32.mrf.mxu0
    %v962 = vadd.f32 0.0, %v961
    %963 = vmatmul.bf16.gmra.mxu0 %v843
    %v964 = vpop.f32.mrf.mxu0
    %v965 = vadd.f32 0.0, %v964
    %v966 = vpop.f32.mrf.mxu0
    %v967 = vadd.f32 0.0, %v966
    %968 = vmatmul.bf16.gmra.mxu0 %v844
    %v969 = vpop.f32.mrf.mxu0
    %v970 = vadd.f32 0.0, %v969
    %v971 = vpop.f32.mrf.mxu0
    %v972 = vadd.f32 0.0, %v971
    %973 = vmatmul.bf16.gmra.mxu0 %v845
    %v974 = vpop.f32.mrf.mxu0
    %v975 = vadd.f32 0.0, %v974
    %v976 = vpop.f32.mrf.mxu0
    %v977 = vadd.f32 0.0, %v976
    %978 = vmatmul.bf16.gmra.mxu0 %v846
    %v979 = vpop.f32.mrf.mxu0
    %v980 = vadd.f32 0.0, %v979
    %v981 = vpop.f32.mrf.mxu0
    %v982 = vadd.f32 0.0, %v981
    %983 = vmatmul.bf16.gmra.mxu0 %v847
    %v984 = vpop.f32.mrf.mxu0
    %v985 = vadd.f32 0.0, %v984
    %v986 = vpop.f32.mrf.mxu0
    %v987 = vadd.f32 0.0, %v986
    %988 = vmatmul.bf16.gmra.mxu0 %v848
    %v989 = vpop.f32.mrf.mxu0
    %v990 = vadd.f32 0.0, %v989
    %v991 = vpop.f32.mrf.mxu0
    %v992 = vadd.f32 0.0, %v991
    %993 = vdwg.mxu0
    %994 = vmatpush.bf16.msra.mxu0 %v928
    %995 = vmatpush.bf16.msra.mxu0 %v926
    %996 = vmatpush.bf16.msra.mxu0 %v924
    %997 = vmatpush.bf16.msra.mxu0 %v922
    %998 = vmatpush.bf16.msra.mxu0 %v920
    %999 = vmatpush.bf16.msra.mxu0 %v918
    %1000 = vmatpush.bf16.msra.mxu0 %v916
    %1001 = vmatpush.bf16.msra.mxu0 %v914
    %1002 = vmatmul.bf16.gmra.mxu0 %v841
    %v1003 = vpop.f32.mrf.mxu0
    %v1004 = vadd.f32 0.0, %v1003
    %v1005 = vpop.f32.mrf.mxu0
    %v1006 = vadd.f32 0.0, %v1005
    %1007 = vmatmul.bf16.gmra.mxu0 %v842
    %v1008 = vpop.f32.mrf.mxu0
    %v1009 = vadd.f32 0.0, %v1008
    %v1010 = vpop.f32.mrf.mxu0
    %v1011 = vadd.f32 0.0, %v1010
    %1012 = vmatmul.bf16.gmra.mxu0 %v843
    %v1013 = vpop.f32.mrf.mxu0
    %v1014 = vadd.f32 0.0, %v1013
    %v1015 = vpop.f32.mrf.mxu0
    %v1016 = vadd.f32 0.0, %v1015
    %1017 = vmatmul.bf16.gmra.mxu0 %v844
    %v1018 = vpop.f32.mrf.mxu0
    %v1019 = vadd.f32 0.0, %v1018
    %v1020 = vpop.f32.mrf.mxu0
    %v1021 = vadd.f32 0.0, %v1020
    %1022 = vmatmul.bf16.gmra.mxu0 %v845
    %v1023 = vpop.f32.mrf.mxu0
    %v1024 = vadd.f32 0.0, %v1023
    %v1025 = vpop.f32.mrf.mxu0
    %v1026 = vadd.f32 0.0, %v1025
    %1027 = vmatmul.bf16.gmra.mxu0 %v846
    %v1028 = vpop.f32.mrf.mxu0
    %v1029 = vadd.f32 0.0, %v1028
    %v1030 = vpop.f32.mrf.mxu0
    %v1031 = vadd.f32 0.0, %v1030
    %1032 = vmatmul.bf16.gmra.mxu0 %v847
    %v1033 = vpop.f32.mrf.mxu0
    %v1034 = vadd.f32 0.0, %v1033
    %v1035 = vpop.f32.mrf.mxu0
    %v1036 = vadd.f32 0.0, %v1035
    %1037 = vmatmul.bf16.gmra.mxu0 %v848
    %v1038 = vpop.f32.mrf.mxu0
    %v1039 = vadd.f32 0.0, %v1038
    %v1040 = vpop.f32.mrf.mxu0
    %v1041 = vadd.f32 0.0, %v1040
    %1042 = vdwg.mxu0
    %v1043 = vld [vmem:[%s9] sm:$0x3]
    %v1045 = vperm.slane %v1043, 0
    %v1046 = vperm.slane %v1043, 1
    %v1049 = vmul.f32 %v955, %v1045
    %v1050 = vmul.f32 %v1004, %v1046
    %v1051 = vmul.f32 %v957, %v1045
    %v1052 = vmul.f32 %v1006, %v1046
    %v1053 = vmul.f32 %v960, %v1045
    %v1054 = vmul.f32 %v1009, %v1046
    %v1055 = vmul.f32 %v962, %v1045
    %v1056 = vmul.f32 %v1011, %v1046
    %v1057 = vmul.f32 %v965, %v1045
    %v1058 = vmul.f32 %v1014, %v1046
    %v1059 = vmul.f32 %v967, %v1045
    %v1060 = vmul.f32 %v1016, %v1046
    %v1061 = vmul.f32 %v970, %v1045
    %v1062 = vmul.f32 %v1019, %v1046
    %v1063 = vmul.f32 %v972, %v1045
    %v1064 = vmul.f32 %v1021, %v1046
    %v1065 = vmul.f32 %v975, %v1045
    %v1066 = vmul.f32 %v1024, %v1046
    %v1067 = vmul.f32 %v977, %v1045
    %v1068 = vmul.f32 %v1026, %v1046
    %v1069 = vmul.f32 %v980, %v1045
    %v1070 = vmul.f32 %v1029, %v1046
    %v1071 = vmul.f32 %v982, %v1045
    %v1072 = vmul.f32 %v1031, %v1046
    %v1073 = vmul.f32 %v985, %v1045
    %v1074 = vmul.f32 %v1034, %v1046
    %v1075 = vmul.f32 %v987, %v1045
    %v1076 = vmul.f32 %v1036, %v1046
    %v1077 = vmul.f32 %v990, %v1045
    %v1078 = vmul.f32 %v1039, %v1046
    %v1079 = vmul.f32 %v992, %v1045
    %v1080 = vmul.f32 %v1041, %v1046
    %v1081 = vld [vmem:[%s10] sm:$0x3]
    %v1083 = vperm.slane %v1081, 0
    %v1084 = vperm.slane %v1081, 1
    %v1087 = vadd.f32 %v1049, %v1083
    %v1088 = vadd.f32 %v1050, %v1084
    %v1089 = vadd.f32 %v1051, %v1083
    %v1090 = vadd.f32 %v1052, %v1084
    %v1091 = vadd.f32 %v1053, %v1083
    %v1092 = vadd.f32 %v1054, %v1084
    %v1093 = vadd.f32 %v1055, %v1083
    %v1094 = vadd.f32 %v1056, %v1084
    %v1095 = vadd.f32 %v1057, %v1083
    %v1096 = vadd.f32 %v1058, %v1084
    %v1097 = vadd.f32 %v1059, %v1083
    %v1098 = vadd.f32 %v1060, %v1084
    %v1099 = vadd.f32 %v1061, %v1083
    %v1100 = vadd.f32 %v1062, %v1084
    %v1101 = vadd.f32 %v1063, %v1083
    %v1102 = vadd.f32 %v1064, %v1084
    %v1103 = vadd.f32 %v1065, %v1083
    %v1104 = vadd.f32 %v1066, %v1084
    %v1105 = vadd.f32 %v1067, %v1083
    %v1106 = vadd.f32 %v1068, %v1084
    %v1107 = vadd.f32 %v1069, %v1083
    %v1108 = vadd.f32 %v1070, %v1084
    %v1109 = vadd.f32 %v1071, %v1083
    %v1110 = vadd.f32 %v1072, %v1084
    %v1111 = vadd.f32 %v1073, %v1083
    %v1112 = vadd.f32 %v1074, %v1084
    %v1113 = vadd.f32 %v1075, %v1083
    %v1114 = vadd.f32 %v1076, %v1084
    %v1115 = vadd.f32 %v1077, %v1083
    %v1116 = vadd.f32 %v1078, %v1084
    %v1117 = vadd.f32 %v1079, %v1083
    %v1118 = vadd.f32 %v1080, %v1084
    %v1119 = vmax.f32 %v1087, 0.0
    %v1120 = vmax.f32 %v1088, 0.0
    %v1121 = vmax.f32 %v1089, 0.0
    %v1122 = vmax.f32 %v1090, 0.0
    %v1123 = vmax.f32 %v1091, 0.0
    %v1124 = vmax.f32 %v1092, 0.0
    %v1125 = vmax.f32 %v1093, 0.0
    %v1126 = vmax.f32 %v1094, 0.0
    %v1127 = vmax.f32 %v1095, 0.0
    %v1128 = vmax.f32 %v1096, 0.0
    %v1129 = vmax.f32 %v1097, 0.0
    %v1130 = vmax.f32 %v1098, 0.0
    %v1131 = vmax.f32 %v1099, 0.0
    %v1132 = vmax.f32 %v1100, 0.0
    %v1133 = vmax.f32 %v1101, 0.0
    %v1134 = vmax.f32 %v1102, 0.0
    %v1135 = vmax.f32 %v1103, 0.0
    %v1136 = vmax.f32 %v1104, 0.0
    %v1137 = vmax.f32 %v1105, 0.0
    %v1138 = vmax.f32 %v1106, 0.0
    %v1139 = vmax.f32 %v1107, 0.0
    %v1140 = vmax.f32 %v1108, 0.0
    %v1141 = vmax.f32 %v1109, 0.0
    %v1142 = vmax.f32 %v1110, 0.0
    %v1143 = vmax.f32 %v1111, 0.0
    %v1144 = vmax.f32 %v1112, 0.0
    %v1145 = vmax.f32 %v1113, 0.0
    %v1146 = vmax.f32 %v1114, 0.0
    %v1147 = vmax.f32 %v1115, 0.0
    %v1148 = vmax.f32 %v1116, 0.0
    %v1149 = vmax.f32 %v1117, 0.0
    %v1150 = vmax.f32 %v1118, 0.0
    %v1151 = vpack.c.bf16 %v1121, %v1119
    %v1152 = vpack.c.bf16 %v1122, %v1120
    %v1153 = vpack.c.bf16 %v1125, %v1123
    %v1154 = vpack.c.bf16 %v1126, %v1124
    %v1155 = vpack.c.bf16 %v1129, %v1127
    %v1156 = vpack.c.bf16 %v1130, %v1128
    %v1157 = vpack.c.bf16 %v1133, %v1131
    %v1158 = vpack.c.bf16 %v1134, %v1132
    %v1159 = vpack.c.bf16 %v1137, %v1135
    %v1160 = vpack.c.bf16 %v1138, %v1136
    %v1161 = vpack.c.bf16 %v1141, %v1139
    %v1162 = vpack.c.bf16 %v1142, %v1140
    %v1163 = vpack.c.bf16 %v1145, %v1143
    %v1164 = vpack.c.bf16 %v1146, %v1144
    %v1165 = vpack.c.bf16 %v1149, %v1147
    %v1166 = vpack.c.bf16 %v1150, %v1148
    %v1167 = vld [vmem:[%s11] sm:$0xf]
    %v1168 = vld [vmem:[%s11 + $0x4] sm:$0xf]
    %v1171 = vunpack.c.l.b16 %v1167
    %v1172 = vunpack.c.l.b16 %v1168
    %v1173 = vpack.c.b16 %v1172, %v1171
    %1175 = vmatpush.bf16.msra.mxu0 %v1165
    %1176 = vmatpush.bf16.msra.mxu0 %v1163
    %1177 = vmatpush.bf16.msra.mxu0 %v1161
    %1178 = vmatpush.bf16.msra.mxu0 %v1159
    %1179 = vmatpush.bf16.msra.mxu0 %v1157
    %1180 = vmatpush.bf16.msra.mxu0 %v1155
    %1181 = vmatpush.bf16.msra.mxu0 %v1153
    %1182 = vmatpush.bf16.msra.mxu0 %v1151
    %1183 = vmatmul.bf16.gmra.mxu0 %v1173
    %v1184 = vpop.f32.mrf.mxu0
    %v1185 = vadd.f32 0.0, %v1184
    %v1186 = vpop.f32.mrf.mxu0
    %v1187 = vadd.f32 0.0, %v1186
    %1188 = vdwg.mxu0
    %1189 = vmatpush.bf16.msra.mxu0 %v1166
    %1190 = vmatpush.bf16.msra.mxu0 %v1164
    %1191 = vmatpush.bf16.msra.mxu0 %v1162
    %1192 = vmatpush.bf16.msra.mxu0 %v1160
    %1193 = vmatpush.bf16.msra.mxu0 %v1158
    %1194 = vmatpush.bf16.msra.mxu0 %v1156
    %1195 = vmatpush.bf16.msra.mxu0 %v1154
    %1196 = vmatpush.bf16.msra.mxu0 %v1152
    %1197 = vmatmul.bf16.gmra.mxu0 %v1173
    %v1198 = vpop.f32.mrf.mxu0
    %v1199 = vadd.f32 0.0, %v1198
    %v1200 = vpop.f32.mrf.mxu0
    %v1201 = vadd.f32 0.0, %v1200
    %1202 = vdwg.mxu0
    %v1203 = vld [vmem:[%s12] sm:$0xff]
    %v1204 = vld [vmem:[%s12 + $0x8] sm:$0xff]
    %1206 = vset.pattern.permute.xlu0 0
    %1207 = vperm.xlu0 %1206, %v1203
    %v1208 = vpop.permute.xlu0 %1207
    %1211 = vset.pattern.permute.xlu0 0
    %1212 = vperm.xlu0 %1211, %v1204
    %v1213 = vpop.permute.xlu0 %1212
    %v1215 = vmul.f32 %v1185, %v1208
    %v1216 = vmul.f32 %v1199, %v1208
    %v1217 = vmul.f32 %v1187, %v1213
    %v1218 = vmul.f32 %v1201, %v1213
    %v1219 = vpack.c.bf16 %v1217, %v1215
    %v1220 = vpack.c.bf16 %v1218, %v1216
    %v1221 = vld [vmem:[#allocation14] sm:$0xff]
    %v1222 = vld [vmem:[#allocation14 + $0x8] sm:$0xff]
    %v1223 = vld [vmem:[#allocation14 + $0x10] sm:$0xff]
    %v1224 = vld [vmem:[#allocation14 + $0x18] sm:$0xff]
    %v1225 = vld [vmem:[#allocation14 + $0x20] sm:$0xff]
    %v1226 = vld [vmem:[#allocation14 + $0x28] sm:$0xff]
    %v1227 = vld [vmem:[#allocation14 + $0x30] sm:$0xff]
    %v1228 = vld [vmem:[#allocation14 + $0x38] sm:$0xff]
    %v1229 = vld [vmem:[#allocation14 + $0x40] sm:$0xff]
    %v1230 = vld [vmem:[#allocation14 + $0x48] sm:$0xff]
    %v1231 = vld [vmem:[#allocation14 + $0x50] sm:$0xff]
    %v1232 = vld [vmem:[#allocation14 + $0x58] sm:$0xff]
    %v1233 = vld [vmem:[#allocation14 + $0x60] sm:$0xff]
    %v1234 = vld [vmem:[#allocation14 + $0x68] sm:$0xff]
    %v1235 = vld [vmem:[#allocation14 + $0x70] sm:$0xff]
    %v1236 = vld [vmem:[#allocation14 + $0x78] sm:$0xff]
    %v1237 = vld [vmem:[#allocation14 + $0x80] sm:$0xff]
    %v1238 = vld [vmem:[#allocation14 + $0x88] sm:$0xff]
    %v1239 = vld [vmem:[#allocation14 + $0x90] sm:$0xff]
    %v1240 = vld [vmem:[#allocation14 + $0x98] sm:$0xff]
    %v1241 = vld [vmem:[#allocation14 + $0xa0] sm:$0xff]
    %v1242 = vld [vmem:[#allocation14 + $0xa8] sm:$0xff]
    %v1243 = vld [vmem:[#allocation14 + $0xb0] sm:$0xff]
    %v1244 = vld [vmem:[#allocation14 + $0xb8] sm:$0xff]
    %v1245 = vld [vmem:[#allocation14 + $0xc0] sm:$0xff]
    %v1246 = vld [vmem:[#allocation14 + $0xc8] sm:$0xff]
    %v1247 = vld [vmem:[#allocation14 + $0xd0] sm:$0xff]
    %v1248 = vld [vmem:[#allocation14 + $0xd8] sm:$0xff]
    %v1249 = vld [vmem:[#allocation14 + $0xe0] sm:$0xff]
    %v1250 = vld [vmem:[#allocation14 + $0xe8] sm:$0xff]
    %v1251 = vld [vmem:[#allocation14 + $0xf0] sm:$0xff]
    %v1252 = vld [vmem:[#allocation14 + $0xf8] sm:$0xff]
    %v1253 = vld [vmem:[#allocation14 + $0x100] sm:$0xff]
    %v1254 = vld [vmem:[#allocation14 + $0x108] sm:$0xff]
    %v1255 = vld [vmem:[#allocation14 + $0x110] sm:$0xff]
    %v1256 = vld [vmem:[#allocation14 + $0x118] sm:$0xff]
    %v1257 = vld [vmem:[#allocation14 + $0x120] sm:$0xff]
    %v1258 = vld [vmem:[#allocation14 + $0x128] sm:$0xff]
    %v1259 = vld [vmem:[#allocation14 + $0x130] sm:$0xff]
    %v1260 = vld [vmem:[#allocation14 + $0x138] sm:$0xff]
    %v1261 = vld [vmem:[#allocation14 + $0x140] sm:$0xff]
    %v1262 = vld [vmem:[#allocation14 + $0x148] sm:$0xff]
    %v1263 = vld [vmem:[#allocation14 + $0x150] sm:$0xff]
    %v1264 = vld [vmem:[#allocation14 + $0x158] sm:$0xff]
    %v1265 = vld [vmem:[#allocation14 + $0x160] sm:$0xff]
    %v1266 = vld [vmem:[#allocation14 + $0x168] sm:$0xff]
    %v1267 = vld [vmem:[#allocation14 + $0x170] sm:$0xff]
    %v1268 = vld [vmem:[#allocation14 + $0x178] sm:$0xff]
    %v1269 = vld [vmem:[#allocation14 + $0x180] sm:$0xff]
    %v1270 = vld [vmem:[#allocation14 + $0x188] sm:$0xff]
    %v1271 = vld [vmem:[#allocation14 + $0x190] sm:$0xff]
    %v1272 = vld [vmem:[#allocation14 + $0x198] sm:$0xff]
    %v1273 = vld [vmem:[#allocation14 + $0x1a0] sm:$0xff]
    %v1274 = vld [vmem:[#allocation14 + $0x1a8] sm:$0xff]
    %v1275 = vld [vmem:[#allocation14 + $0x1b0] sm:$0xff]
    %v1276 = vld [vmem:[#allocation14 + $0x1b8] sm:$0xff]
    %v1277 = vld [vmem:[#allocation14 + $0x1c0] sm:$0xff]
    %v1278 = vld [vmem:[#allocation14 + $0x1c8] sm:$0xff]
    %v1279 = vld [vmem:[#allocation14 + $0x1d0] sm:$0xff]
    %v1280 = vld [vmem:[#allocation14 + $0x1d8] sm:$0xff]
    %v1281 = vld [vmem:[#allocation14 + $0x1e0] sm:$0xff]
    %v1282 = vld [vmem:[#allocation14 + $0x1e8] sm:$0xff]
    %v1283 = vld [vmem:[#allocation14 + $0x1f0] sm:$0xff]
    %v1284 = vld [vmem:[#allocation14 + $0x1f8] sm:$0xff]
    %v1349 = vunpack.c.l.b16 %v1221
    %v1350 = vunpack.c.h.b16 %v1221
    %v1351 = vunpack.c.l.b16 %v1222
    %v1352 = vunpack.c.h.b16 %v1222
    %v1353 = vunpack.c.l.b16 %v1223
    %v1354 = vunpack.c.h.b16 %v1223
    %v1355 = vunpack.c.l.b16 %v1224
    %v1356 = vunpack.c.h.b16 %v1224
    %v1357 = vunpack.c.l.b16 %v1225
    %v1358 = vunpack.c.h.b16 %v1225
    %v1359 = vunpack.c.l.b16 %v1226
    %v1360 = vunpack.c.h.b16 %v1226
    %v1361 = vunpack.c.l.b16 %v1227
    %v1362 = vunpack.c.h.b16 %v1227
    %v1363 = vunpack.c.l.b16 %v1228
    %v1364 = vunpack.c.h.b16 %v1228
    %v1365 = vunpack.c.l.b16 %v1229
    %v1366 = vunpack.c.h.b16 %v1229
    %v1367 = vunpack.c.l.b16 %v1230
    %v1368 = vunpack.c.h.b16 %v1230
    %v1369 = vunpack.c.l.b16 %v1231
    %v1370 = vunpack.c.h.b16 %v1231
    %v1371 = vunpack.c.l.b16 %v1232
    %v1372 = vunpack.c.h.b16 %v1232
    %v1373 = vunpack.c.l.b16 %v1233
    %v1374 = vunpack.c.h.b16 %v1233
    %v1375 = vunpack.c.l.b16 %v1234
    %v1376 = vunpack.c.h.b16 %v1234
    %v1377 = vunpack.c.l.b16 %v1235
    %v1378 = vunpack.c.h.b16 %v1235
    %v1379 = vunpack.c.l.b16 %v1236
    %v1380 = vunpack.c.h.b16 %v1236
    %v1381 = vunpack.c.l.b16 %v1237
    %v1382 = vunpack.c.h.b16 %v1237
    %v1383 = vunpack.c.l.b16 %v1238
    %v1384 = vunpack.c.h.b16 %v1238
    %v1385 = vunpack.c.l.b16 %v1239
    %v1386 = vunpack.c.h.b16 %v1239
    %v1387 = vunpack.c.l.b16 %v1240
    %v1388 = vunpack.c.h.b16 %v1240
    %v1389 = vunpack.c.l.b16 %v1241
    %v1390 = vunpack.c.h.b16 %v1241
    %v1391 = vunpack.c.l.b16 %v1242
    %v1392 = vunpack.c.h.b16 %v1242
    %v1393 = vunpack.c.l.b16 %v1243
    %v1394 = vunpack.c.h.b16 %v1243
    %v1395 = vunpack.c.l.b16 %v1244
    %v1396 = vunpack.c.h.b16 %v1244
    %v1397 = vunpack.c.l.b16 %v1245
    %v1398 = vunpack.c.h.b16 %v1245
    %v1399 = vunpack.c.l.b16 %v1246
    %v1400 = vunpack.c.h.b16 %v1246
    %v1401 = vunpack.c.l.b16 %v1247
    %v1402 = vunpack.c.h.b16 %v1247
    %v1403 = vunpack.c.l.b16 %v1248
    %v1404 = vunpack.c.h.b16 %v1248
    %v1405 = vunpack.c.l.b16 %v1249
    %v1406 = vunpack.c.h.b16 %v1249
    %v1407 = vunpack.c.l.b16 %v1250
    %v1408 = vunpack.c.h.b16 %v1250
    %v1409 = vunpack.c.l.b16 %v1251
    %v1410 = vunpack.c.h.b16 %v1251
    %v1411 = vunpack.c.l.b16 %v1252
    %v1412 = vunpack.c.h.b16 %v1252
    %v1413 = vunpack.c.l.b16 %v1253
    %v1414 = vunpack.c.h.b16 %v1253
    %v1415 = vunpack.c.l.b16 %v1254
    %v1416 = vunpack.c.h.b16 %v1254
    %v1417 = vunpack.c.l.b16 %v1255
    %v1418 = vunpack.c.h.b16 %v1255
    %v1419 = vunpack.c.l.b16 %v1256
    %v1420 = vunpack.c.h.b16 %v1256
    %v1421 = vunpack.c.l.b16 %v1257
    %v1422 = vunpack.c.h.b16 %v1257
    %v1423 = vunpack.c.l.b16 %v1258
    %v1424 = vunpack.c.h.b16 %v1258
    %v1425 = vunpack.c.l.b16 %v1259
    %v1426 = vunpack.c.h.b16 %v1259
    %v1427 = vunpack.c.l.b16 %v1260
    %v1428 = vunpack.c.h.b16 %v1260
    %v1429 = vunpack.c.l.b16 %v1261
    %v1430 = vunpack.c.h.b16 %v1261
    %v1431 = vunpack.c.l.b16 %v1262
    %v1432 = vunpack.c.h.b16 %v1262
    %v1433 = vunpack.c.l.b16 %v1263
    %v1434 = vunpack.c.h.b16 %v1263
    %v1435 = vunpack.c.l.b16 %v1264
    %v1436 = vunpack.c.h.b16 %v1264
    %v1437 = vunpack.c.l.b16 %v1265
    %v1438 = vunpack.c.h.b16 %v1265
    %v1439 = vunpack.c.l.b16 %v1266
    %v1440 = vunpack.c.h.b16 %v1266
    %v1441 = vunpack.c.l.b16 %v1267
    %v1442 = vunpack.c.h.b16 %v1267
    %v1443 = vunpack.c.l.b16 %v1268
    %v1444 = vunpack.c.h.b16 %v1268
    %v1445 = vunpack.c.l.b16 %v1269
    %v1446 = vunpack.c.h.b16 %v1269
    %v1447 = vunpack.c.l.b16 %v1270
    %v1448 = vunpack.c.h.b16 %v1270
    %v1449 = vunpack.c.l.b16 %v1271
    %v1450 = vunpack.c.h.b16 %v1271
    %v1451 = vunpack.c.l.b16 %v1272
    %v1452 = vunpack.c.h.b16 %v1272
    %v1453 = vunpack.c.l.b16 %v1273
    %v1454 = vunpack.c.h.b16 %v1273
    %v1455 = vunpack.c.l.b16 %v1274
    %v1456 = vunpack.c.h.b16 %v1274
    %v1457 = vunpack.c.l.b16 %v1275
    %v1458 = vunpack.c.h.b16 %v1275
    %v1459 = vunpack.c.l.b16 %v1276
    %v1460 = vunpack.c.h.b16 %v1276
    %v1461 = vunpack.c.l.b16 %v1277
    %v1462 = vunpack.c.h.b16 %v1277
    %v1463 = vunpack.c.l.b16 %v1278
    %v1464 = vunpack.c.h.b16 %v1278
    %v1465 = vunpack.c.l.b16 %v1279
    %v1466 = vunpack.c.h.b16 %v1279
    %v1467 = vunpack.c.l.b16 %v1280
    %v1468 = vunpack.c.h.b16 %v1280
    %v1469 = vunpack.c.l.b16 %v1281
    %v1470 = vunpack.c.h.b16 %v1281
    %v1471 = vunpack.c.l.b16 %v1282
    %v1472 = vunpack.c.h.b16 %v1282
    %v1473 = vunpack.c.l.b16 %v1283
    %v1474 = vunpack.c.h.b16 %v1283
    %v1475 = vunpack.c.l.b16 %v1284
    %v1476 = vunpack.c.h.b16 %v1284
    %v1477 = vpack.c.b16 %v1353, %v1349
    %v1478 = vpack.c.b16 %v1354, %v1350
    %v1479 = vpack.c.b16 %v1355, %v1351
    %v1480 = vpack.c.b16 %v1356, %v1352
    %v1481 = vpack.c.b16 %v1361, %v1357
    %v1482 = vpack.c.b16 %v1362, %v1358
    %v1483 = vpack.c.b16 %v1363, %v1359
    %v1484 = vpack.c.b16 %v1364, %v1360
    %v1485 = vpack.c.b16 %v1369, %v1365
    %v1486 = vpack.c.b16 %v1370, %v1366
    %v1487 = vpack.c.b16 %v1371, %v1367
    %v1488 = vpack.c.b16 %v1372, %v1368
    %v1489 = vpack.c.b16 %v1377, %v1373
    %v1490 = vpack.c.b16 %v1378, %v1374
    %v1491 = vpack.c.b16 %v1379, %v1375
    %v1492 = vpack.c.b16 %v1380, %v1376
    %v1493 = vpack.c.b16 %v1385, %v1381
    %v1494 = vpack.c.b16 %v1386, %v1382
    %v1495 = vpack.c.b16 %v1387, %v1383
    %v1496 = vpack.c.b16 %v1388, %v1384
    %v1497 = vpack.c.b16 %v1393, %v1389
    %v1498 = vpack.c.b16 %v1394, %v1390
    %v1499 = vpack.c.b16 %v1395, %v1391
    %v1500 = vpack.c.b16 %v1396, %v1392
    %v1501 = vpack.c.b16 %v1401, %v1397
    %v1502 = vpack.c.b16 %v1402, %v1398
    %v1503 = vpack.c.b16 %v1403, %v1399
    %v1504 = vpack.c.b16 %v1404, %v1400
    %v1505 = vpack.c.b16 %v1409, %v1405
    %v1506 = vpack.c.b16 %v1410, %v1406
    %v1507 = vpack.c.b16 %v1411, %v1407
    %v1508 = vpack.c.b16 %v1412, %v1408
    %v1509 = vpack.c.b16 %v1417, %v1413
    %v1510 = vpack.c.b16 %v1418, %v1414
    %v1511 = vpack.c.b16 %v1419, %v1415
    %v1512 = vpack.c.b16 %v1420, %v1416
    %v1513 = vpack.c.b16 %v1425, %v1421
    %v1514 = vpack.c.b16 %v1426, %v1422
    %v1515 = vpack.c.b16 %v1427, %v1423
    %v1516 = vpack.c.b16 %v1428, %v1424
    %v1517 = vpack.c.b16 %v1433, %v1429
    %v1518 = vpack.c.b16 %v1434, %v1430
    %v1519 = vpack.c.b16 %v1435, %v1431
    %v1520 = vpack.c.b16 %v1436, %v1432
    %v1521 = vpack.c.b16 %v1441, %v1437
    %v1522 = vpack.c.b16 %v1442, %v1438
    %v1523 = vpack.c.b16 %v1443, %v1439
    %v1524 = vpack.c.b16 %v1444, %v1440
    %v1525 = vpack.c.b16 %v1449, %v1445
    %v1526 = vpack.c.b16 %v1450, %v1446
    %v1527 = vpack.c.b16 %v1451, %v1447
    %v1528 = vpack.c.b16 %v1452, %v1448
    %v1529 = vpack.c.b16 %v1457, %v1453
    %v1530 = vpack.c.b16 %v1458, %v1454
    %v1531 = vpack.c.b16 %v1459, %v1455
    %v1532 = vpack.c.b16 %v1460, %v1456
    %v1533 = vpack.c.b16 %v1465, %v1461
    %v1534 = vpack.c.b16 %v1466, %v1462
    %v1535 = vpack.c.b16 %v1467, %v1463
    %v1536 = vpack.c.b16 %v1468, %v1464
    %v1537 = vpack.c.b16 %v1473, %v1469
    %v1538 = vpack.c.b16 %v1474, %v1470
    %v1539 = vpack.c.b16 %v1475, %v1471
    %v1540 = vpack.c.b16 %v1476, %v1472
    %1605 = vmatpush.bf16.msra.mxu0 %v1505
    %1606 = vmatpush.bf16.msra.mxu0 %v1501
    %1607 = vmatpush.bf16.msra.mxu0 %v1497
    %1608 = vmatpush.bf16.msra.mxu0 %v1493
    %1609 = vmatpush.bf16.msra.mxu0 %v1489
    %1610 = vmatpush.bf16.msra.mxu0 %v1485
    %1611 = vmatpush.bf16.msra.mxu0 %v1481
    %1612 = vmatpush.bf16.msra.mxu0 %v1477
    %1613 = vmatmul.bf16.gmra.mxu0 %v1219
    %v1614 = vpop.f32.mrf.mxu0
    %v1615 = vadd.f32 0.0, %v1614
    %v1616 = vpop.f32.mrf.mxu0
    %v1617 = vadd.f32 0.0, %v1616
    %1618 = vdwg.mxu0
    %1619 = vmatpush.bf16.msra.mxu0 %v1537
    %1620 = vmatpush.bf16.msra.mxu0 %v1533
    %1621 = vmatpush.bf16.msra.mxu0 %v1529
    %1622 = vmatpush.bf16.msra.mxu0 %v1525
    %1623 = vmatpush.bf16.msra.mxu0 %v1521
    %1624 = vmatpush.bf16.msra.mxu0 %v1517
    %1625 = vmatpush.bf16.msra.mxu0 %v1513
    %1626 = vmatpush.bf16.msra.mxu0 %v1509
    %1627 = vmatmul.bf16.gmra.mxu0 %v1220
    %v1628 = vpop.f32.mrf.mxu0
    %v1629 = vadd.f32 %v1615, %v1628
    %v1630 = vpop.f32.mrf.mxu0
    %v1631 = vadd.f32 %v1617, %v1630
    %1632 = vdwg.mxu0
    %1633 = vmatpush.bf16.msra.mxu0 %v1506
    %1634 = vmatpush.bf16.msra.mxu0 %v1502
    %1635 = vmatpush.bf16.msra.mxu0 %v1498
    %1636 = vmatpush.bf16.msra.mxu0 %v1494
    %1637 = vmatpush.bf16.msra.mxu0 %v1490
    %1638 = vmatpush.bf16.msra.mxu0 %v1486
    %1639 = vmatpush.bf16.msra.mxu0 %v1482
    %1640 = vmatpush.bf16.msra.mxu0 %v1478
    %1641 = vmatmul.bf16.gmra.mxu0 %v1219
    %v1642 = vpop.f32.mrf.mxu0
    %v1643 = vadd.f32 0.0, %v1642
    %v1644 = vpop.f32.mrf.mxu0
    %v1645 = vadd.f32 0.0, %v1644
    %1646 = vdwg.mxu0
    %1647 = vmatpush.bf16.msra.mxu0 %v1538
    %1648 = vmatpush.bf16.msra.mxu0 %v1534
    %1649 = vmatpush.bf16.msra.mxu0 %v1530
    %1650 = vmatpush.bf16.msra.mxu0 %v1526
    %1651 = vmatpush.bf16.msra.mxu0 %v1522
    %1652 = vmatpush.bf16.msra.mxu0 %v1518
    %1653 = vmatpush.bf16.msra.mxu0 %v1514
    %1654 = vmatpush.bf16.msra.mxu0 %v1510
    %1655 = vmatmul.bf16.gmra.mxu0 %v1220
    %v1656 = vpop.f32.mrf.mxu0
    %v1657 = vadd.f32 %v1643, %v1656
    %v1658 = vpop.f32.mrf.mxu0
    %v1659 = vadd.f32 %v1645, %v1658
    %1660 = vdwg.mxu0
    %1661 = vmatpush.bf16.msra.mxu0 %v1507
    %1662 = vmatpush.bf16.msra.mxu0 %v1503
    %1663 = vmatpush.bf16.msra.mxu0 %v1499
    %1664 = vmatpush.bf16.msra.mxu0 %v1495
    %1665 = vmatpush.bf16.msra.mxu0 %v1491
    %1666 = vmatpush.bf16.msra.mxu0 %v1487
    %1667 = vmatpush.bf16.msra.mxu0 %v1483
    %1668 = vmatpush.bf16.msra.mxu0 %v1479
    %1669 = vmatmul.bf16.gmra.mxu0 %v1219
    %v1670 = vpop.f32.mrf.mxu0
    %v1671 = vadd.f32 0.0, %v1670
    %v1672 = vpop.f32.mrf.mxu0
    %v1673 = vadd.f32 0.0, %v1672
    %1674 = vdwg.mxu0
    %1675 = vmatpush.bf16.msra.mxu0 %v1539
    %1676 = vmatpush.bf16.msra.mxu0 %v1535
    %1677 = vmatpush.bf16.msra.mxu0 %v1531
    %1678 = vmatpush.bf16.msra.mxu0 %v1527
    %1679 = vmatpush.bf16.msra.mxu0 %v1523
    %1680 = vmatpush.bf16.msra.mxu0 %v1519
    %1681 = vmatpush.bf16.msra.mxu0 %v1515
    %1682 = vmatpush.bf16.msra.mxu0 %v1511
    %1683 = vmatmul.bf16.gmra.mxu0 %v1220
    %v1684 = vpop.f32.mrf.mxu0
    %v1685 = vadd.f32 %v1671, %v1684
    %v1686 = vpop.f32.mrf.mxu0
    %v1687 = vadd.f32 %v1673, %v1686
    %1688 = vdwg.mxu0
    %1689 = vmatpush.bf16.msra.mxu0 %v1508
    %1690 = vmatpush.bf16.msra.mxu0 %v1504
    %1691 = vmatpush.bf16.msra.mxu0 %v1500
    %1692 = vmatpush.bf16.msra.mxu0 %v1496
    %1693 = vmatpush.bf16.msra.mxu0 %v1492
    %1694 = vmatpush.bf16.msra.mxu0 %v1488
    %1695 = vmatpush.bf16.msra.mxu0 %v1484
    %1696 = vmatpush.bf16.msra.mxu0 %v1480
    %1697 = vmatmul.bf16.gmra.mxu0 %v1219
    %v1698 = vpop.f32.mrf.mxu0
    %v1699 = vadd.f32 0.0, %v1698
    %v1700 = vpop.f32.mrf.mxu0
    %v1701 = vadd.f32 0.0, %v1700
    %1702 = vdwg.mxu0
    %1703 = vmatpush.bf16.msra.mxu0 %v1540
    %1704 = vmatpush.bf16.msra.mxu0 %v1536
    %1705 = vmatpush.bf16.msra.mxu0 %v1532
    %1706 = vmatpush.bf16.msra.mxu0 %v1528
    %1707 = vmatpush.bf16.msra.mxu0 %v1524
    %1708 = vmatpush.bf16.msra.mxu0 %v1520
    %1709 = vmatpush.bf16.msra.mxu0 %v1516
    %1710 = vmatpush.bf16.msra.mxu0 %v1512
    %1711 = vmatmul.bf16.gmra.mxu0 %v1220
    %v1712 = vpop.f32.mrf.mxu0
    %v1713 = vadd.f32 %v1699, %v1712
    %v1714 = vpop.f32.mrf.mxu0
    %v1715 = vadd.f32 %v1701, %v1714
    %1716 = vdwg.mxu0
    %v1717 = vld [vmem:[%s14] sm:$0xf]
    %v1719 = vperm.slane %v1717, 0
    %v1720 = vperm.slane %v1717, 1
    %v1721 = vperm.slane %v1717, 2
    %v1722 = vperm.slane %v1717, 3
    %v1727 = vmul.f32 %v1629, %v1719
    %v1728 = vmul.f32 %v1657, %v1720
    %v1729 = vmul.f32 %v1685, %v1721
    %v1730 = vmul.f32 %v1713, %v1722
    %v1731 = vmul.f32 %v1631, %v1719
    %v1732 = vmul.f32 %v1659, %v1720
    %v1733 = vmul.f32 %v1687, %v1721
    %v1734 = vmul.f32 %v1715, %v1722
    %v1735 = vld [vmem:[%s15] sm:$0xf]
    %v1737 = vperm.slane %v1735, 0
    %v1738 = vperm.slane %v1735, 1
    %v1739 = vperm.slane %v1735, 2
    %v1740 = vperm.slane %v1735, 3
    %v1745 = vadd.f32 %v1727, %v1737
    %v1746 = vadd.f32 %v1728, %v1738
    %v1747 = vadd.f32 %v1729, %v1739
    %v1748 = vadd.f32 %v1730, %v1740
    %v1749 = vadd.f32 %v1731, %v1737
    %v1750 = vadd.f32 %v1732, %v1738
    %v1751 = vadd.f32 %v1733, %v1739
    %v1752 = vadd.f32 %v1734, %v1740
    %v1753 = vmax.f32 %v1745, 0.0
    %v1754 = vmax.f32 %v1746, 0.0
    %v1755 = vmax.f32 %v1747, 0.0
    %v1756 = vmax.f32 %v1748, 0.0
    %v1757 = vmax.f32 %v1749, 0.0
    %v1758 = vmax.f32 %v1750, 0.0
    %v1759 = vmax.f32 %v1751, 0.0
    %v1760 = vmax.f32 %v1752, 0.0
    %v1761 = vpack.c.bf16 %v1757, %v1753
    %v1762 = vpack.c.bf16 %v1758, %v1754
    %v1763 = vpack.c.bf16 %v1759, %v1755
    %v1764 = vpack.c.bf16 %v1760, %v1756
    %v1765 = vld [vmem:[#allocation16] sm:$0xf]
    %v1766 = vld [vmem:[#allocation16 + $0x4] sm:$0xf]
    %v1767 = vld [vmem:[#allocation16 + $0x8] sm:$0xf]
    %v1768 = vld [vmem:[#allocation16 + $0xc] sm:$0xf]
    %v1769 = vld [vmem:[#allocation16 + $0x10] sm:$0xf]
    %v1770 = vld [vmem:[#allocation16 + $0x14] sm:$0xf]
    %v1771 = vld [vmem:[#allocation16 + $0x18] sm:$0xf]
    %v1772 = vld [vmem:[#allocation16 + $0x1c] sm:$0xf]
    %v1773 = vld [vmem:[#allocation16 + $0x20] sm:$0xf]
    %v1774 = vld [vmem:[#allocation16 + $0x24] sm:$0xf]
    %v1775 = vld [vmem:[#allocation16 + $0x28] sm:$0xf]
    %v1776 = vld [vmem:[#allocation16 + $0x2c] sm:$0xf]
    %v1777 = vld [vmem:[#allocation16 + $0x30] sm:$0xf]
    %v1778 = vld [vmem:[#allocation16 + $0x34] sm:$0xf]
    %v1779 = vld [vmem:[#allocation16 + $0x38] sm:$0xf]
    %v1780 = vld [vmem:[#allocation16 + $0x3c] sm:$0xf]
    %v1781 = vld [vmem:[#allocation16 + $0x40] sm:$0xf]
    %v1782 = vld [vmem:[#allocation16 + $0x44] sm:$0xf]
    %v1783 = vld [vmem:[#allocation16 + $0x48] sm:$0xf]
    %v1784 = vld [vmem:[#allocation16 + $0x4c] sm:$0xf]
    %v1785 = vld [vmem:[#allocation16 + $0x50] sm:$0xf]
    %v1786 = vld [vmem:[#allocation16 + $0x54] sm:$0xf]
    %v1787 = vld [vmem:[#allocation16 + $0x58] sm:$0xf]
    %v1788 = vld [vmem:[#allocation16 + $0x5c] sm:$0xf]
    %v1789 = vld [vmem:[#allocation16 + $0x60] sm:$0xf]
    %v1790 = vld [vmem:[#allocation16 + $0x64] sm:$0xf]
    %v1791 = vld [vmem:[#allocation16 + $0x68] sm:$0xf]
    %v1792 = vld [vmem:[#allocation16 + $0x6c] sm:$0xf]
    %v1793 = vld [vmem:[#allocation16 + $0x70] sm:$0xf]
    %v1794 = vld [vmem:[#allocation16 + $0x74] sm:$0xf]
    %v1795 = vld [vmem:[#allocation16 + $0x78] sm:$0xf]
    %v1796 = vld [vmem:[#allocation16 + $0x7c] sm:$0xf]
    %v1797 = vld [vmem:[#allocation16 + $0x80] sm:$0xf]
    %v1798 = vld [vmem:[#allocation16 + $0x84] sm:$0xf]
    %v1799 = vld [vmem:[#allocation16 + $0x88] sm:$0xf]
    %v1800 = vld [vmem:[#allocation16 + $0x8c] sm:$0xf]
    %v1801 = vld [vmem:[#allocation16 + $0x90] sm:$0xf]
    %v1802 = vld [vmem:[#allocation16 + $0x94] sm:$0xf]
    %v1803 = vld [vmem:[#allocation16 + $0x98] sm:$0xf]
    %v1804 = vld [vmem:[#allocation16 + $0x9c] sm:$0xf]
    %v1805 = vld [vmem:[#allocation16 + $0xa0] sm:$0xf]
    %v1806 = vld [vmem:[#allocation16 + $0xa4] sm:$0xf]
    %v1807 = vld [vmem:[#allocation16 + $0xa8] sm:$0xf]
    %v1808 = vld [vmem:[#allocation16 + $0xac] sm:$0xf]
    %v1809 = vld [vmem:[#allocation16 + $0xb0] sm:$0xf]
    %v1810 = vld [vmem:[#allocation16 + $0xb4] sm:$0xf]
    %v1811 = vld [vmem:[#allocation16 + $0xb8] sm:$0xf]
    %v1812 = vld [vmem:[#allocation16 + $0xbc] sm:$0xf]
    %v1813 = vld [vmem:[#allocation16 + $0xc0] sm:$0xf]
    %v1814 = vld [vmem:[#allocation16 + $0xc4] sm:$0xf]
    %v1815 = vld [vmem:[#allocation16 + $0xc8] sm:$0xf]
    %v1816 = vld [vmem:[#allocation16 + $0xcc] sm:$0xf]
    %v1817 = vld [vmem:[#allocation16 + $0xd0] sm:$0xf]
    %v1818 = vld [vmem:[#allocation16 + $0xd4] sm:$0xf]
    %v1819 = vld [vmem:[#allocation16 + $0xd8] sm:$0xf]
    %v1820 = vld [vmem:[#allocation16 + $0xdc] sm:$0xf]
    %v1821 = vld [vmem:[#allocation16 + $0xe0] sm:$0xf]
    %v1822 = vld [vmem:[#allocation16 + $0xe4] sm:$0xf]
    %v1823 = vld [vmem:[#allocation16 + $0xe8] sm:$0xf]
    %v1824 = vld [vmem:[#allocation16 + $0xec] sm:$0xf]
    %v1825 = vld [vmem:[#allocation16 + $0xf0] sm:$0xf]
    %v1826 = vld [vmem:[#allocation16 + $0xf4] sm:$0xf]
    %v1827 = vld [vmem:[#allocation16 + $0xf8] sm:$0xf]
    %v1828 = vld [vmem:[#allocation16 + $0xfc] sm:$0xf]
    %v1829 = vld [vmem:[%s17] sm:$0x1]
    %v1831 = vperm.slane %v1829, 0
    %v1897 = vunpack.c.l.b16 %v1765
    %v1898 = vunpack.c.l.b16 %v1766
    %v1899 = vunpack.c.l.b16 %v1767
    %v1900 = vunpack.c.l.b16 %v1768
    %v1901 = vunpack.c.l.b16 %v1769
    %v1902 = vunpack.c.l.b16 %v1770
    %v1903 = vunpack.c.l.b16 %v1771
    %v1904 = vunpack.c.l.b16 %v1772
    %v1905 = vunpack.c.l.b16 %v1773
    %v1906 = vunpack.c.l.b16 %v1774
    %v1907 = vunpack.c.l.b16 %v1775
    %v1908 = vunpack.c.l.b16 %v1776
    %v1909 = vunpack.c.l.b16 %v1777
    %v1910 = vunpack.c.l.b16 %v1778
    %v1911 = vunpack.c.l.b16 %v1779
    %v1912 = vunpack.c.l.b16 %v1780
    %v1913 = vunpack.c.l.b16 %v1781
    %v1914 = vunpack.c.l.b16 %v1782
    %v1915 = vunpack.c.l.b16 %v1783
    %v1916 = vunpack.c.l.b16 %v1784
    %v1917 = vunpack.c.l.b16 %v1785
    %v1918 = vunpack.c.l.b16 %v1786
    %v1919 = vunpack.c.l.b16 %v1787
    %v1920 = vunpack.c.l.b16 %v1788
    %v1921 = vunpack.c.l.b16 %v1789
    %v1922 = vunpack.c.l.b16 %v1790
    %v1923 = vunpack.c.l.b16 %v1791
    %v1924 = vunpack.c.l.b16 %v1792
    %v1925 = vunpack.c.l.b16 %v1793
    %v1926 = vunpack.c.l.b16 %v1794
    %v1927 = vunpack.c.l.b16 %v1795
    %v1928 = vunpack.c.l.b16 %v1796
    %v1929 = vunpack.c.l.b16 %v1797
    %v1930 = vunpack.c.l.b16 %v1798
    %v1931 = vunpack.c.l.b16 %v1799
    %v1932 = vunpack.c.l.b16 %v1800
    %v1933 = vunpack.c.l.b16 %v1801
    %v1934 = vunpack.c.l.b16 %v1802
    %v1935 = vunpack.c.l.b16 %v1803
    %v1936 = vunpack.c.l.b16 %v1804
    %v1937 = vunpack.c.l.b16 %v1805
    %v1938 = vunpack.c.l.b16 %v1806
    %v1939 = vunpack.c.l.b16 %v1807
    %v1940 = vunpack.c.l.b16 %v1808
    %v1941 = vunpack.c.l.b16 %v1809
    %v1942 = vunpack.c.l.b16 %v1810
    %v1943 = vunpack.c.l.b16 %v1811
    %v1944 = vunpack.c.l.b16 %v1812
    %v1945 = vunpack.c.l.b16 %v1813
    %v1946 = vunpack.c.l.b16 %v1814
    %v1947 = vunpack.c.l.b16 %v1815
    %v1948 = vunpack.c.l.b16 %v1816
    %v1949 = vunpack.c.l.b16 %v1817
    %v1950 = vunpack.c.l.b16 %v1818
    %v1951 = vunpack.c.l.b16 %v1819
    %v1952 = vunpack.c.l.b16 %v1820
    %v1953 = vunpack.c.l.b16 %v1821
    %v1954 = vunpack.c.l.b16 %v1822
    %v1955 = vunpack.c.l.b16 %v1823
    %v1956 = vunpack.c.l.b16 %v1824
    %v1957 = vunpack.c.l.b16 %v1825
    %v1958 = vunpack.c.l.b16 %v1826
    %v1959 = vunpack.c.l.b16 %v1827
    %v1960 = vunpack.c.l.b16 %v1828
    %v1961 = vpack.c.b16 %v1898, %v1897
    %v1962 = vpack.c.b16 %v1900, %v1899
    %v1963 = vpack.c.b16 %v1902, %v1901
    %v1964 = vpack.c.b16 %v1904, %v1903
    %v1965 = vpack.c.b16 %v1906, %v1905
    %v1966 = vpack.c.b16 %v1908, %v1907
    %v1967 = vpack.c.b16 %v1910, %v1909
    %v1968 = vpack.c.b16 %v1912, %v1911
    %v1969 = vpack.c.b16 %v1914, %v1913
    %v1970 = vpack.c.b16 %v1916, %v1915
    %v1971 = vpack.c.b16 %v1918, %v1917
    %v1972 = vpack.c.b16 %v1920, %v1919
    %v1973 = vpack.c.b16 %v1922, %v1921
    %v1974 = vpack.c.b16 %v1924, %v1923
    %v1975 = vpack.c.b16 %v1926, %v1925
    %v1976 = vpack.c.b16 %v1928, %v1927
    %v1977 = vpack.c.b16 %v1930, %v1929
    %v1978 = vpack.c.b16 %v1932, %v1931
    %v1979 = vpack.c.b16 %v1934, %v1933
    %v1980 = vpack.c.b16 %v1936, %v1935
    %v1981 = vpack.c.b16 %v1938, %v1937
    %v1982 = vpack.c.b16 %v1940, %v1939
    %v1983 = vpack.c.b16 %v1942, %v1941
    %v1984 = vpack.c.b16 %v1944, %v1943
    %v1985 = vpack.c.b16 %v1946, %v1945
    %v1986 = vpack.c.b16 %v1948, %v1947
    %v1987 = vpack.c.b16 %v1950, %v1949
    %v1988 = vpack.c.b16 %v1952, %v1951
    %v1989 = vpack.c.b16 %v1954, %v1953
    %v1990 = vpack.c.b16 %v1956, %v1955
    %v1991 = vpack.c.b16 %v1958, %v1957
    %v1992 = vpack.c.b16 %v1960, %v1959
    %2025 = vmatpush.bf16.msra.mxu0 %v1968
    %2026 = vmatpush.bf16.msra.mxu0 %v1967
    %2027 = vmatpush.bf16.msra.mxu0 %v1966
    %2028 = vmatpush.bf16.msra.mxu0 %v1965
    %2029 = vmatpush.bf16.msra.mxu0 %v1964
    %2030 = vmatpush.bf16.msra.mxu0 %v1963
    %2031 = vmatpush.bf16.msra.mxu0 %v1962
    %2032 = vmatpush.bf16.msra.mxu0 %v1961
    %2033 = vmatmul.bf16.gmra.mxu0 %v1761
    %v2034 = vpop.f32.mrf.mxu0
    %v2035 = vadd.f32 %v1831, %v2034
    %v2036 = vpop.f32.mrf.mxu0
    %v2037 = vadd.f32 %v1831, %v2036
    %2038 = vdwg.mxu0
    %2039 = vmatpush.bf16.msra.mxu0 %v1976
    %2040 = vmatpush.bf16.msra.mxu0 %v1975
    %2041 = vmatpush.bf16.msra.mxu0 %v1974
    %2042 = vmatpush.bf16.msra.mxu0 %v1973
    %2043 = vmatpush.bf16.msra.mxu0 %v1972
    %2044 = vmatpush.bf16.msra.mxu0 %v1971
    %2045 = vmatpush.bf16.msra.mxu0 %v1970
    %2046 = vmatpush.bf16.msra.mxu0 %v1969
    %2047 = vmatmul.bf16.gmra.mxu0 %v1762
    %v2048 = vpop.f32.mrf.mxu0
    %v2049 = vadd.f32 %v2035, %v2048
    %v2050 = vpop.f32.mrf.mxu0
    %v2051 = vadd.f32 %v2037, %v2050
    %2052 = vdwg.mxu0
    %2053 = vmatpush.bf16.msra.mxu0 %v1984
    %2054 = vmatpush.bf16.msra.mxu0 %v1983
    %2055 = vmatpush.bf16.msra.mxu0 %v1982
    %2056 = vmatpush.bf16.msra.mxu0 %v1981
    %2057 = vmatpush.bf16.msra.mxu0 %v1980
    %2058 = vmatpush.bf16.msra.mxu0 %v1979
    %2059 = vmatpush.bf16.msra.mxu0 %v1978
    %2060 = vmatpush.bf16.msra.mxu0 %v1977
    %2061 = vmatmul.bf16.gmra.mxu0 %v1763
    %v2062 = vpop.f32.mrf.mxu0
    %v2063 = vadd.f32 %v2049, %v2062
    %v2064 = vpop.f32.mrf.mxu0
    %v2065 = vadd.f32 %v2051, %v2064
    %2066 = vdwg.mxu0
    %2067 = vmatpush.bf16.msra.mxu0 %v1992
    %2068 = vmatpush.bf16.msra.mxu0 %v1991
    %2069 = vmatpush.bf16.msra.mxu0 %v1990
    %2070 = vmatpush.bf16.msra.mxu0 %v1989
    %2071 = vmatpush.bf16.msra.mxu0 %v1988
    %2072 = vmatpush.bf16.msra.mxu0 %v1987
    %2073 = vmatpush.bf16.msra.mxu0 %v1986
    %2074 = vmatpush.bf16.msra.mxu0 %v1985
    %2075 = vmatmul.bf16.gmra.mxu0 %v1764
    %v2076 = vpop.f32.mrf.mxu0
    %v2077 = vadd.f32 %v2063, %v2076
    %v2078 = vpop.f32.mrf.mxu0
    %v2079 = vadd.f32 %v2065, %v2078
    %2080 = vdwg.mxu0
    %2081 = vst [vmem:[#allocation17] sm:$0xff] %v2077
    %2082 = vst [vmem:[#allocation17 + $0x8] sm:$0xff] %v2079
    // Predicated region
    $region110: #{tpu_custom_call.1} parent=1 // pred_check
      _
    $region111: #{tpu_custom_call.1} parent=1 // pred_check_branch
      %2084 = sbr.rel (0) target = $region113
    $region112: #{tpu_custom_call.1} parent=1 // pred_region
      %2086 = vsyncadd [#allocation4], 0
      %s2087 = sshll.u32 [#allocation17], 4
      %s2088 = int_to_ptr.vmem [resolvable:$true] %s2087
      %s2089 = sshll.u32 %s18, 4
      %s2090 = int_to_ptr.hbm [resolvable:$true] %s2089
      %2095 = dma.vmem_to_hbm [thread:$0]  %s2088, 256, %s2090, [#allocation4], 128, 128, 8
    $region113: #{tpu_custom_call.1} parent=1 // pred_fallthru
      _
    // Predicated region
    $region114: #{tpu_custom_call.1} parent=1 // pred_check
      _
    $region115: #{tpu_custom_call.1} parent=1 // pred_check_branch
      %2097 = sbr.rel (0) target = $region117
    $region116: #{tpu_custom_call.1} parent=1 // pred_region
      %2099 = dma.done [#allocation4], 256
    $region117: #{tpu_custom_call.1} parent=1 // pred_fallthru
      _
    %2100 = vsyncpa [#allocation3], 1
    %2101 = vsyncpa [#allocation6], 1
    %2102 = vsyncpa [#allocation9], 1
    %2103 = vsyncpa [#allocation12], 1
    %2104 = vsyncpa [#allocation15], 1
    %2105 = vsyncpa [#allocation4], 1

</llo_original>
